<compile_context>
chip_gen: v6e
topology: v6e:2x2x1
jax: 0.10.0
libtpu: 0.0.40
codegen_flags: <defaults>
</compile_context>

<pallas_src>
import jax
import jax.numpy as jnp
from jax.experimental import pallas as pl
from jax.experimental.pallas import tpu as pltpu


# --------------------------------------------------------------------------- #
# Kernel
# --------------------------------------------------------------------------- #
def cbam_kernel(x_ref, w1t_ref, w2t_ref, t_avg_ref, t_max_ref, o_ref):
    """x/o: (bt, C, HW) f32.  w1t: (C, hid_pad), w2t: (hid_pad, C),
    t_avg/t_max: (HW, HW) Toeplitz matrices of the 7x7 SAME conv."""
    x = x_ref[...]                                        # (bt, C, HW)

    # ---------------- channel attention ----------------
    avg_c = jnp.mean(x, axis=-1)                          # (bt, C)  lane reduce
    max_c = jnp.max(x, axis=-1)                           # (bt, C)
    w1t = w1t_ref[...]
    w2t = w2t_ref[...]

    def mlp(v):                                           # (bt, C) -> (bt, C)
        h = jnp.maximum(
            jnp.dot(v, w1t, preferred_element_type=jnp.float32), 0.0)
        return jnp.dot(h, w2t, preferred_element_type=jnp.float32)

    chan = jax.nn.sigmoid(mlp(avg_c) + mlp(max_c))        # (bt, C)
    x_ch = x * chan[:, :, None]                           # (bt, C, HW) lane-dense

    # -------- spatial attention: 7x7 SAME conv == two Toeplitz matmuls --------
    avg_sp = jnp.mean(x_ch, axis=1)                       # (bt, HW) sublane reduce
    max_sp = jnp.max(x_ch, axis=1)                        # (bt, HW)
    conv = (jnp.dot(avg_sp, t_avg_ref[...], preferred_element_type=jnp.float32)
            + jnp.dot(max_sp, t_max_ref[...], preferred_element_type=jnp.float32))
    spat = jax.nn.sigmoid(conv)                           # (bt, HW)

    # ---------------- combine + residual ----------------
    o_ref[...] = x_ch * spat[:, None, :] + x              # lane-dense store


# --------------------------------------------------------------------------- #
# Host-side helpers
# --------------------------------------------------------------------------- #
def _build_spatial_toeplitz(w_spatial, H, W, K):
    """(1, 2, K, K) conv weight -> two (H*W, H*W) matrices (avg-channel, max-channel)
    with T_c[j, i] = w[0, c, jy-iy+P, jx-ix+P] when both offsets lie in [0, K), so
    (map_c @ T_c) summed over c == SAME-padded cross-correlation (PyTorch Conv2d)."""
    P = K // 2
    HW = H * W
    idx = jnp.arange(HW)
    ry = idx // W                                          # row of each flat index
    rx = idx % W                                           # col of each flat index
    dy = ry[:, None] - ry[None, :] + P                     # (HW_in, HW_out)
    dx = rx[:, None] - rx[None, :] + P
    valid = (dy >= 0) & (dy < K) & (dx >= 0) & (dx < K)
    dyc = jnp.clip(dy, 0, K - 1)
    dxc = jnp.clip(dx, 0, K - 1)
    w = w_spatial.reshape(2, K, K).astype(jnp.float32)
    taps = w[:, dyc, dxc]                                  # (2, HW, HW)
    t = jnp.where(valid[None, :, :], taps, 0.0)
    return t[0], t[1]


def _pick_batch_block(batch, c, hw, *, resident_bytes=0,
                      vmem_budget_bytes=12 * 1024 * 1024, max_bt=128):
    """Batch elements per grid step, sized against a portable VMEM budget
    (~12 MiB fits the v5e 16 MiB scoped default; well under v6e/v7x defaults).
    4x accounts for double-buffered input + output f32 blocks."""
    per_batch = 4 * c * hw * 4
    avail = max(vmem_budget_bytes - resident_bytes, per_batch)
    return int(max(1, min(batch, max_bt, avail // per_batch)))


def _run_pallas(x_flat, w1t, w2t, t_avg, t_max, bt, single_buffer_consts):
    b_pad, c, hw = x_flat.shape
    hid_pad = w1t.shape[1]
    const_kwargs = {}
    if single_buffer_consts:
        # Constant-index_map operands never change across the grid: single-buffer
        # them so the Toeplitz pair / weights do not eat double the VMEM.
        const_kwargs = dict(pipeline_mode=pl.Buffered(1))
    grid = (b_pad // bt,)
    return pl.pallas_call(
        cbam_kernel,
        out_shape=jax.ShapeDtypeStruct((b_pad, c, hw), jnp.float32),
        grid_spec=pltpu.PrefetchScalarGridSpec(
            num_scalar_prefetch=0,
            grid=grid,
            in_specs=[
                pl.BlockSpec((bt, c, hw), lambda b: (b, 0, 0)),
                pl.BlockSpec((c, hid_pad), lambda b: (0, 0), **const_kwargs),
                pl.BlockSpec((hid_pad, c), lambda b: (0, 0), **const_kwargs),
                pl.BlockSpec((hw, hw), lambda b: (0, 0), **const_kwargs),
                pl.BlockSpec((hw, hw), lambda b: (0, 0), **const_kwargs),
            ],
            out_specs=pl.BlockSpec((bt, c, hw), lambda b: (b, 0, 0)),
        ),
        compiler_params=pltpu.CompilerParams(
            dimension_semantics=("parallel",)),
    )(x_flat, w1t, w2t, t_avg, t_max)


def cbam_attention(x_nchw, w_mlp1, w_mlp2, w_spatial, *, kernel_size=7):
    """x_nchw: (B, C, H, W); w_mlp1: (hid, C); w_mlp2: (C, hid); w_spatial: (1,2,K,K)."""
    B, C, H, W = x_nchw.shape
    hid = w_mlp1.shape[0]
    K = kernel_size
    HW = H * W

    x_flat = x_nchw.reshape(B, C, HW).astype(jnp.float32)   # layout-preserving

    # MLP weights transposed for row-major matmul; hidden dim zero-padded to a
    # lane-dense width.  Exact: ReLU(0) = 0 and zero rows of w2 contribute 0.
    hid_pad = max(128, -(-hid // 128) * 128)
    w1t = jnp.zeros((C, hid_pad), jnp.float32).at[:, :hid].set(
        jnp.transpose(w_mlp1).astype(jnp.float32))
    w2t = jnp.zeros((hid_pad, C), jnp.float32).at[:hid, :].set(
        jnp.transpose(w_mlp2).astype(jnp.float32))

    t_avg, t_max = _build_spatial_toeplitz(w_spatial, H, W, K)   # (HW, HW) each

    resident_bytes = 2 * 4 * (t_avg.size + t_max.size + w1t.size + w2t.size)
    bt = _pick_batch_block(B, C, HW, resident_bytes=resident_bytes)

    # Zero-pad the batch so any B works with a large block (padded rows are exact
    # zeros through the whole pipeline and are sliced off below).
    b_pad = -(-B // bt) * bt
    if b_pad != B:
        x_flat = jnp.pad(x_flat, ((0, b_pad - B), (0, 0), (0, 0)))

    try:
        out_flat = _run_pallas(x_flat, w1t, w2t, t_avg, t_max, bt, True)
    except Exception:
        # Fallback for jax versions without single-buffer pipeline_mode support.
        out_flat = _run_pallas(x_flat, w1t, w2t, t_avg, t_max, bt, False)

    return out_flat[:B].reshape(B, C, H, W)


# --------------------------------------------------------------------------- #
# Pure-JAX reference (matches the PyTorch forward, NCHW)
# --------------------------------------------------------------------------- #
def cbam_reference(x, w_mlp1, w_mlp2, w_spatial):
    avg = jnp.mean(x, axis=(2, 3))   # (B, C)
    mx = jnp.max(x, axis=(2, 3))     # (B, C)

    def mlp(v):
        return jnp.maximum(v @ w_mlp1.T, 0.0) @ w_mlp2.T

    chan = jax.nn.sigmoid(mlp(avg) + mlp(mx))           # (B, C)
    x_ch = x * chan[:, :, None, None]
    avg_sp = jnp.mean(x_ch, axis=1, keepdims=True)
    max_sp = jnp.max(x_ch, axis=1, keepdims=True)
    sp_in = jnp.concatenate([avg_sp, max_sp], axis=1)   # (B, 2, H, W)
    conv = jax.lax.conv_general_dilated(
        sp_in, w_spatial, window_strides=(1, 1), padding="SAME",
        dimension_numbers=("NCHW", "OIHW", "NCHW"))
    sp = jax.nn.sigmoid(conv)
    return x_ch * sp + x


if __name__ == "__main__":
    B, C, H, W = 2, 32, 16, 16
    reduction_ratio, K = 16, 7
    hid = C // reduction_ratio

    key = jax.random.PRNGKey(0)
    k1, k2, k3, kx = jax.random.split(key, 4)
    # Deterministic synthetic parameters (shapes per nn.Module.__init__)
    w_mlp1 = jax.random.normal(k1, (hid, C), jnp.float32) * 0.1        # Conv2d(C, C//r, 1)
    w_mlp2 = jax.random.normal(k2, (C, hid), jnp.float32) * 0.1        # Conv2d(C//r, C, 1)
    w_spatial = jax.random.normal(k3, (1, 2, K, K), jnp.float32) * 0.1 # Conv2d(2, 1, 7)
    x = jax.random.normal(kx, (B, C, H, W), jnp.float32)

    out = cbam_attention(x, w_mlp1, w_mlp2, w_spatial, kernel_size=K)
    out = jax.block_until_ready(out)

    ref = jax.block_until_ready(cbam_reference(x, w_mlp1, w_mlp2, w_spatial))
    assert out.shape == (B, C, H, W)
    assert jnp.allclose(out, ref, rtol=1e-4, atol=1e-4), (
        f"max abs err {jnp.max(jnp.abs(out - ref))}")

    print("KERNEL_OK")
</pallas_src>

<mosaic_0001>
module attributes {stable_mosaic.version = 11 : i64} {
  func.func @cbam_kernel(%arg0: i32, %arg1: memref<2x32x256xf32, #tpu.memory_space<vmem>>, %arg2: memref<32x128xf32, #tpu.memory_space<vmem>>, %arg3: memref<128x32xf32, #tpu.memory_space<vmem>>, %arg4: memref<256x256xf32, #tpu.memory_space<vmem>>, %arg5: memref<256x256xf32, #tpu.memory_space<vmem>>, %arg6: memref<2x32x256xf32, #tpu.memory_space<vmem>>) attributes {dimension_semantics = [#tpu.dimension_semantics<parallel>], iteration_bounds = array<i64: 1>, scalar_prefetch = 0 : i64, scratch_operands = 0 : i64, tpu.core_type = #tpu.core_type<tc>, window_params = [{transform_indices = @transform_0, window_bounds = array<i64: 2, 32, 256>}, {pipeline_mode = #tpu.pipeline_mode<synchronous>, transform_indices = @transform_1, window_bounds = array<i64: 32, 128>}, {pipeline_mode = #tpu.pipeline_mode<synchronous>, transform_indices = @transform_2, window_bounds = array<i64: 128, 32>}, {pipeline_mode = #tpu.pipeline_mode<synchronous>, transform_indices = @transform_3, window_bounds = array<i64: 256, 256>}, {pipeline_mode = #tpu.pipeline_mode<synchronous>, transform_indices = @transform_4, window_bounds = array<i64: 256, 256>}, {transform_indices = @transform_5, window_bounds = array<i64: 2, 32, 256>}]} {
    %c0 = arith.constant 0 : index
    %c0_0 = arith.constant 0 : index
    %c0_1 = arith.constant 0 : index
    %0 = vector.load %arg1[%c0, %c0_0, %c0_1] : memref<2x32x256xf32, #tpu.memory_space<vmem>>, vector<2x32x256xf32>
    %cst = arith.constant dense<0.000000e+00> : vector<2x32xf32>
    %1 = vector.multi_reduction <add>, %0, %cst [2] : vector<2x32x256xf32> to vector<2x32xf32>
    %cst_2 = arith.constant 2.560000e+02 : f32
    %2 = vector.broadcast %cst_2 : f32 to vector<2x32xf32>
    %3 = arith.divf %1, %2 : vector<2x32xf32>
    %cst_3 = arith.constant dense<0xFF800000> : vector<2x32xf32>
    %4 = vector.multi_reduction <maximumf>, %0, %cst_3 [2] : vector<2x32x256xf32> to vector<2x32xf32>
    %c0_4 = arith.constant 0 : index
    %c0_5 = arith.constant 0 : index
    %5 = vector.load %arg2[%c0_4, %c0_5] : memref<32x128xf32, #tpu.memory_space<vmem>>, vector<32x128xf32>
    %c0_6 = arith.constant 0 : index
    %c0_7 = arith.constant 0 : index
    %6 = vector.load %arg3[%c0_6, %c0_7] : memref<128x32xf32, #tpu.memory_space<vmem>>, vector<128x32xf32>
    %cst_8 = arith.constant dense<0.000000e+00> : vector<2x128xf32>
    %7 = tpu.matmul %3, %5, %cst_8 {dimension_numbers = #tpu.dot_dimension_numbers<[1], [0], [0], [1], [0, 0, 1, 1], [], []>} : vector<2x32xf32>, vector<32x128xf32>, vector<2x128xf32> -> vector<2x128xf32>
    %cst_9 = arith.constant 0.000000e+00 : f32
    %8 = vector.broadcast %cst_9 : f32 to vector<2x128xf32>
    %9 = arith.maximumf %7, %8 : vector<2x128xf32>
    %cst_10 = arith.constant dense<0.000000e+00> : vector<2x32xf32>
    %10 = tpu.matmul %9, %6, %cst_10 {dimension_numbers = #tpu.dot_dimension_numbers<[1], [0], [0], [1], [0, 0, 1, 1], [], []>} : vector<2x128xf32>, vector<128x32xf32>, vector<2x32xf32> -> vector<2x32xf32>
    %cst_11 = arith.constant dense<0.000000e+00> : vector<2x128xf32>
    %11 = tpu.matmul %4, %5, %cst_11 {dimension_numbers = #tpu.dot_dimension_numbers<[1], [0], [0], [1], [0, 0, 1, 1], [], []>} : vector<2x32xf32>, vector<32x128xf32>, vector<2x128xf32> -> vector<2x128xf32>
    %cst_12 = arith.constant 0.000000e+00 : f32
    %12 = vector.broadcast %cst_12 : f32 to vector<2x128xf32>
    %13 = arith.maximumf %11, %12 : vector<2x128xf32>
    %cst_13 = arith.constant dense<0.000000e+00> : vector<2x32xf32>
    %14 = tpu.matmul %13, %6, %cst_13 {dimension_numbers = #tpu.dot_dimension_numbers<[1], [0], [0], [1], [0, 0, 1, 1], [], []>} : vector<2x128xf32>, vector<128x32xf32>, vector<2x32xf32> -> vector<2x32xf32>
    %15 = arith.addf %10, %14 : vector<2x32xf32>
    %16 = arith.negf %15 : vector<2x32xf32>
    %17 = math.exp %16 : vector<2x32xf32>
    %cst_14 = arith.constant 1.000000e+00 : f32
    %18 = vector.broadcast %cst_14 : f32 to vector<2x32xf32>
    %19 = arith.addf %18, %17 : vector<2x32xf32>
    %20 = arith.divf %18, %19 : vector<2x32xf32>
    %21 = vector.shape_cast %20 : vector<2x32xf32> to vector<2x32x1xf32>
    %22 = vector.broadcast %21 : vector<2x32x1xf32> to vector<2x32x256xf32>
    %23 = arith.mulf %0, %22 : vector<2x32x256xf32>
    %cst_15 = arith.constant dense<0.000000e+00> : vector<2x256xf32>
    %24 = vector.multi_reduction <add>, %23, %cst_15 [1] : vector<2x32x256xf32> to vector<2x256xf32>
    %cst_16 = arith.constant 3.200000e+01 : f32
    %25 = vector.broadcast %cst_16 : f32 to vector<2x256xf32>
    %26 = arith.divf %24, %25 : vector<2x256xf32>
    %cst_17 = arith.constant dense<0xFF800000> : vector<2x256xf32>
    %27 = vector.multi_reduction <maximumf>, %23, %cst_17 [1] : vector<2x32x256xf32> to vector<2x256xf32>
    %c0_18 = arith.constant 0 : index
    %c0_19 = arith.constant 0 : index
    %28 = vector.load %arg4[%c0_18, %c0_19] : memref<256x256xf32, #tpu.memory_space<vmem>>, vector<256x256xf32>
    %cst_20 = arith.constant dense<0.000000e+00> : vector<2x256xf32>
    %29 = tpu.matmul %26, %28, %cst_20 {dimension_numbers = #tpu.dot_dimension_numbers<[1], [0], [0], [1], [0, 0, 1, 1], [], []>} : vector<2x256xf32>, vector<256x256xf32>, vector<2x256xf32> -> vector<2x256xf32>
    %c0_21 = arith.constant 0 : index
    %c0_22 = arith.constant 0 : index
    %30 = vector.load %arg5[%c0_21, %c0_22] : memref<256x256xf32, #tpu.memory_space<vmem>>, vector<256x256xf32>
    %cst_23 = arith.constant dense<0.000000e+00> : vector<2x256xf32>
    %31 = tpu.matmul %27, %30, %cst_23 {dimension_numbers = #tpu.dot_dimension_numbers<[1], [0], [0], [1], [0, 0, 1, 1], [], []>} : vector<2x256xf32>, vector<256x256xf32>, vector<2x256xf32> -> vector<2x256xf32>
    %32 = arith.addf %29, %31 : vector<2x256xf32>
    %33 = arith.negf %32 : vector<2x256xf32>
    %34 = math.exp %33 : vector<2x256xf32>
    %cst_24 = arith.constant 1.000000e+00 : f32
    %35 = vector.broadcast %cst_24 : f32 to vector<2x256xf32>
    %36 = arith.addf %35, %34 : vector<2x256xf32>
    %37 = arith.divf %35, %36 : vector<2x256xf32>
    %38 = vector.shape_cast %37 : vector<2x256xf32> to vector<2x1x256xf32>
    %39 = vector.broadcast %38 : vector<2x1x256xf32> to vector<2x32x256xf32>
    %40 = arith.mulf %23, %39 : vector<2x32x256xf32>
    %41 = arith.addf %40, %0 : vector<2x32x256xf32>
    %c0_25 = arith.constant 0 : index
    %c0_26 = arith.constant 0 : index
    %c0_27 = arith.constant 0 : index
    %42 = vector.load %arg6[%c0_25, %c0_26, %c0_27] : memref<2x32x256xf32, #tpu.memory_space<vmem>>, vector<2x32x256xf32>
    tpu.vector_store %arg6[%c0_25, %c0_26, %c0_27], %41 {strides = array<i32>} : memref<2x32x256xf32, #tpu.memory_space<vmem>>, vector<2x32x256xf32>,
    return
  }
  func.func @transform_0(%arg0: i32) -> (i32, i32, i32) {
    %c0_i32 = arith.constant 0 : i32
    %c0_i32_0 = arith.constant 0 : i32
    %c0_i32_1 = arith.constant 0 : i32
    return %arg0, %c0_i32, %c0_i32_0 : i32, i32, i32
  }
  func.func @transform_1(%arg0: i32) -> (i32, i32) {
    %c0_i32 = arith.constant 0 : i32
    %c0_i32_0 = arith.constant 0 : i32
    %c0_i32_1 = arith.constant 0 : i32
    return %c0_i32, %c0_i32_0 : i32, i32
  }
  func.func @transform_2(%arg0: i32) -> (i32, i32) {
    %c0_i32 = arith.constant 0 : i32
    %c0_i32_0 = arith.constant 0 : i32
    %c0_i32_1 = arith.constant 0 : i32
    return %c0_i32, %c0_i32_0 : i32, i32
  }
  func.func @transform_3(%arg0: i32) -> (i32, i32) {
    %c0_i32 = arith.constant 0 : i32
    %c0_i32_0 = arith.constant 0 : i32
    %c0_i32_1 = arith.constant 0 : i32
    return %c0_i32, %c0_i32_0 : i32, i32
  }
  func.func @transform_4(%arg0: i32) -> (i32, i32) {
    %c0_i32 = arith.constant 0 : i32
    %c0_i32_0 = arith.constant 0 : i32
    %c0_i32_1 = arith.constant 0 : i32
    return %c0_i32, %c0_i32_0 : i32, i32
  }
  func.func @transform_5(%arg0: i32) -> (i32, i32, i32) {
    %c0_i32 = arith.constant 0 : i32
    %c0_i32_0 = arith.constant 0 : i32
    %c0_i32_1 = arith.constant 0 : i32
    return %arg0, %c0_i32, %c0_i32_0 : i32, i32, i32
  }
}

module attributes {stable_mosaic.version = 11 : i64} {
  func.func @cbam_kernel(%arg0: i32, %arg1: memref<2x32x256xf32, #tpu.memory_space<vmem>>, %arg2: memref<32x128xf32, #tpu.memory_space<vmem>>, %arg3: memref<128x32xf32, #tpu.memory_space<vmem>>, %arg4: memref<256x256xf32, #tpu.memory_space<vmem>>, %arg5: memref<256x256xf32, #tpu.memory_space<vmem>>, %arg6: memref<2x32x256xf32, #tpu.memory_space<vmem>>) attributes {dimension_semantics = [#tpu.dimension_semantics<parallel>], iteration_bounds = array<i64: 1>, scalar_prefetch = 0 : i64, scratch_operands = 0 : i64, tpu.core_type = #tpu.core_type<tc>, window_params = [{transform_indices = @transform_0, window_bounds = array<i64: 2, 32, 256>}, {pipeline_mode = #tpu.pipeline_mode<synchronous>, transform_indices = @transform_1, window_bounds = array<i64: 32, 128>}, {pipeline_mode = #tpu.pipeline_mode<synchronous>, transform_indices = @transform_2, window_bounds = array<i64: 128, 32>}, {pipeline_mode = #tpu.pipeline_mode<synchronous>, transform_indices = @transform_3, window_bounds = array<i64: 256, 256>}, {pipeline_mode = #tpu.pipeline_mode<synchronous>, transform_indices = @transform_4, window_bounds = array<i64: 256, 256>}, {transform_indices = @transform_5, window_bounds = array<i64: 2, 32, 256>}]} {
    %c0 = arith.constant 0 : index
    %c0_0 = arith.constant 0 : index
    %c0_1 = arith.constant 0 : index
    %0 = vector.load %arg1[%c0, %c0_0, %c0_1] : memref<2x32x256xf32, #tpu.memory_space<vmem>>, vector<2x32x256xf32>
    %cst = arith.constant dense<0.000000e+00> : vector<2x32xf32>
    %1 = vector.multi_reduction <add>, %0, %cst [2] : vector<2x32x256xf32> to vector<2x32xf32>
    %cst_2 = arith.constant 2.560000e+02 : f32
    %2 = vector.broadcast %cst_2 : f32 to vector<2x32xf32>
    %3 = arith.divf %1, %2 : vector<2x32xf32>
    %cst_3 = arith.constant dense<0xFF800000> : vector<2x32xf32>
    %4 = vector.multi_reduction <maximumf>, %0, %cst_3 [2] : vector<2x32x256xf32> to vector<2x32xf32>
    %c0_4 = arith.constant 0 : index
    %c0_5 = arith.constant 0 : index
    %5 = vector.load %arg2[%c0_4, %c0_5] : memref<32x128xf32, #tpu.memory_space<vmem>>, vector<32x128xf32>
    %c0_6 = arith.constant 0 : index
    %c0_7 = arith.constant 0 : index
    %6 = vector.load %arg3[%c0_6, %c0_7] : memref<128x32xf32, #tpu.memory_space<vmem>>, vector<128x32xf32>
    %cst_8 = arith.constant dense<0.000000e+00> : vector<2x128xf32>
    %7 = tpu.matmul %3, %5, %cst_8 {dimension_numbers = #tpu.dot_dimension_numbers<[1], [0], [0], [1], [0, 0, 1, 1], [], []>} : vector<2x32xf32>, vector<32x128xf32>, vector<2x128xf32> -> vector<2x128xf32>
    %cst_9 = arith.constant 0.000000e+00 : f32
    %8 = vector.broadcast %cst_9 : f32 to vector<2x128xf32>
    %9 = arith.maximumf %7, %8 : vector<2x128xf32>
    %cst_10 = arith.constant dense<0.000000e+00> : vector<2x32xf32>
    %10 = tpu.matmul %9, %6, %cst_10 {dimension_numbers = #tpu.dot_dimension_numbers<[1], [0], [0], [1], [0, 0, 1, 1], [], []>} : vector<2x128xf32>, vector<128x32xf32>, vector<2x32xf32> -> vector<2x32xf32>
    %cst_11 = arith.constant dense<0.000000e+00> : vector<2x128xf32>
    %11 = tpu.matmul %4, %5, %cst_11 {dimension_numbers = #tpu.dot_dimension_numbers<[1], [0], [0], [1], [0, 0, 1, 1], [], []>} : vector<2x32xf32>, vector<32x128xf32>, vector<2x128xf32> -> vector<2x128xf32>
    %cst_12 = arith.constant 0.000000e+00 : f32
    %12 = vector.broadcast %cst_12 : f32 to vector<2x128xf32>
    %13 = arith.maximumf %11, %12 : vector<2x128xf32>
    %cst_13 = arith.constant dense<0.000000e+00> : vector<2x32xf32>
    %14 = tpu.matmul %13, %6, %cst_13 {dimension_numbers = #tpu.dot_dimension_numbers<[1], [0], [0], [1], [0, 0, 1, 1], [], []>} : vector<2x128xf32>, vector<128x32xf32>, vector<2x32xf32> -> vector<2x32xf32>
    %15 = arith.addf %10, %14 : vector<2x32xf32>
    %16 = arith.negf %15 : vector<2x32xf32>
    %17 = math.exp %16 : vector<2x32xf32>
    %cst_14 = arith.constant 1.000000e+00 : f32
    %18 = vector.broadcast %cst_14 : f32 to vector<2x32xf32>
    %19 = arith.addf %18, %17 : vector<2x32xf32>
    %20 = arith.divf %18, %19 : vector<2x32xf32>
    %21 = vector.shape_cast %20 : vector<2x32xf32> to vector<2x32x1xf32>
    %22 = vector.broadcast %21 : vector<2x32x1xf32> to vector<2x32x256xf32>
    %23 = arith.mulf %0, %22 : vector<2x32x256xf32>
    %cst_15 = arith.constant dense<0.000000e+00> : vector<2x256xf32>
    %24 = vector.multi_reduction <add>, %23, %cst_15 [1] : vector<2x32x256xf32> to vector<2x256xf32>
    %cst_16 = arith.constant 3.200000e+01 : f32
    %25 = vector.broadcast %cst_16 : f32 to vector<2x256xf32>
    %26 = arith.divf %24, %25 : vector<2x256xf32>
    %cst_17 = arith.constant dense<0xFF800000> : vector<2x256xf32>
    %27 = vector.multi_reduction <maximumf>, %23, %cst_17 [1] : vector<2x32x256xf32> to vector<2x256xf32>
    %c0_18 = arith.constant 0 : index
    %c0_19 = arith.constant 0 : index
    %28 = vector.load %arg4[%c0_18, %c0_19] : memref<256x256xf32, #tpu.memory_space<vmem>>, vector<256x256xf32>
    %cst_20 = arith.constant dense<0.000000e+00> : vector<2x256xf32>
    %29 = tpu.matmul %26, %28, %cst_20 {dimension_numbers = #tpu.dot_dimension_numbers<[1], [0], [0], [1], [0, 0, 1, 1], [], []>} : vector<2x256xf32>, vector<256x256xf32>, vector<2x256xf32> -> vector<2x256xf32>
    %c0_21 = arith.constant 0 : index
    %c0_22 = arith.constant 0 : index
    %30 = vector.load %arg5[%c0_21, %c0_22] : memref<256x256xf32, #tpu.memory_space<vmem>>, vector<256x256xf32>
    %cst_23 = arith.constant dense<0.000000e+00> : vector<2x256xf32>
    %31 = tpu.matmul %27, %30, %cst_23 {dimension_numbers = #tpu.dot_dimension_numbers<[1], [0], [0], [1], [0, 0, 1, 1], [], []>} : vector<2x256xf32>, vector<256x256xf32>, vector<2x256xf32> -> vector<2x256xf32>
    %32 = arith.addf %29, %31 : vector<2x256xf32>
    %33 = arith.negf %32 : vector<2x256xf32>
    %34 = math.exp %33 : vector<2x256xf32>
    %cst_24 = arith.constant 1.000000e+00 : f32
    %35 = vector.broadcast %cst_24 : f32 to vector<2x256xf32>
    %36 = arith.addf %35, %34 : vector<2x256xf32>
    %37 = arith.divf %35, %36 : vector<2x256xf32>
    %38 = vector.shape_cast %37 : vector<2x256xf32> to vector<2x1x256xf32>
    %39 = vector.broadcast %38 : vector<2x1x256xf32> to vector<2x32x256xf32>
    %40 = arith.mulf %23, %39 : vector<2x32x256xf32>
    %41 = arith.addf %40, %0 : vector<2x32x256xf32>
    %c0_25 = arith.constant 0 : index
    %c0_26 = arith.constant 0 : index
    %c0_27 = arith.constant 0 : index
    %42 = vector.load %arg6[%c0_25, %c0_26, %c0_27] : memref<2x32x256xf32, #tpu.memory_space<vmem>>, vector<2x32x256xf32>
    tpu.vector_store %arg6[%c0_25, %c0_26, %c0_27], %41 {strides = array<i32>} : memref<2x32x256xf32, #tpu.memory_space<vmem>>, vector<2x32x256xf32>,
    return
  }
  func.func @transform_0(%arg0: i32) -> (i32, i32, i32) {
    %c0_i32 = arith.constant 0 : i32
    %c0_i32_0 = arith.constant 0 : i32
    %c0_i32_1 = arith.constant 0 : i32
    return %arg0, %c0_i32, %c0_i32_0 : i32, i32, i32
  }
  func.func @transform_1(%arg0: i32) -> (i32, i32) {
    %c0_i32 = arith.constant 0 : i32
    %c0_i32_0 = arith.constant 0 : i32
    %c0_i32_1 = arith.constant 0 : i32
    return %c0_i32, %c0_i32_0 : i32, i32
  }
  func.func @transform_2(%arg0: i32) -> (i32, i32) {
    %c0_i32 = arith.constant 0 : i32
    %c0_i32_0 = arith.constant 0 : i32
    %c0_i32_1 = arith.constant 0 : i32
    return %c0_i32, %c0_i32_0 : i32, i32
  }
  func.func @transform_3(%arg0: i32) -> (i32, i32) {
    %c0_i32 = arith.constant 0 : i32
    %c0_i32_0 = arith.constant 0 : i32
    %c0_i32_1 = arith.constant 0 : i32
    return %c0_i32, %c0_i32_0 : i32, i32
  }
  func.func @transform_4(%arg0: i32) -> (i32, i32) {
    %c0_i32 = arith.constant 0 : i32
    %c0_i32_0 = arith.constant 0 : i32
    %c0_i32_1 = arith.constant 0 : i32
    return %c0_i32, %c0_i32_0 : i32, i32
  }
  func.func @transform_5(%arg0: i32) -> (i32, i32, i32) {
    %c0_i32 = arith.constant 0 : i32
    %c0_i32_0 = arith.constant 0 : i32
    %c0_i32_1 = arith.constant 0 : i32
    return %arg0, %c0_i32, %c0_i32_0 : i32, i32, i32
  }
}

</mosaic_0001>

<llo_original>
// kernel: tpu_custom_call.1
$region0: #{tpu_custom_call.1}
  #allocation0 [shape = 'u32[]', space=smem, size = 0x4, offset = 0x4, fixed_abs, tag = 'smem constant byte address 0x4 - core index']
  #allocation1 [shape = 'u32[144,128]{1,0:T(1,128)}', space=vmem, size = 0x12000, scoped, tag = 'internal scratch']
  %s0 = inlined_call_operand.vmem [shape: f32[2,32,256], index: 0, kind: input, shape index: {}]
  %s1 = inlined_call_operand.vmem [shape: f32[32,128], index: 1, kind: input, shape index: {}]
  %s2 = inlined_call_operand.vmem [shape: f32[128,32], index: 2, kind: input, shape index: {}]
  %s3 = inlined_call_operand.hbm [shape: f32[256,256], index: 3, kind: input, shape index: {}]
  %s4 = inlined_call_operand.hbm [shape: f32[256,256], index: 4, kind: input, shape index: {}]
  %s5 = inlined_call_operand.hbm [shape: f32[2,32,256], index: 5, kind: output, shape index: {}]
  %s6 = sld [smem:[#allocation0]]
  $region38: #{tpu_custom_call.1} parent=0
    _
  %s8 = ssub.s32 1, %s6
  %s9 = scalar_select 0, %s8, %s6
  $region1: #{tpu_custom_call.1} parent=0
    #allocation2 [shape = 'u8[262144]{0}', space=vmem, size = 0x40000, scoped, tag = 'input window, operand 3, single buffered']
    #allocation3 [shape = 's32[1]{0}', space=sflag, size = 0x4, scoped, tag = 'scoped memory for tpu_custom_call.1']
    #allocation4 [shape = 's32[1]{0}', space=sflag, size = 0x4, scoped, tag = 'scoped memory for tpu_custom_call.1']
    #allocation5 [shape = 'u8[262144]{0}', space=vmem, size = 0x40000, scoped, tag = 'input window, operand 4, single buffered']
    #allocation6 [shape = 's32[1]{0}', space=sflag, size = 0x4, scoped, tag = 'scoped memory for tpu_custom_call.1']
    #allocation7 [shape = 'u8[65536]{0}', space=vmem, size = 0x10000, scoped, tag = 'output window, operand 0, single buffered']
    %10 = vsyncpa [#allocation3], 0
    %11 = vsyncpa [#allocation6], 0
    %12 = vsyncpa [#allocation4], 0
    // Predicated region
    $region2: #{tpu_custom_call.1} parent=1 // pred_check
      _
    $region3: #{tpu_custom_call.1} parent=1 // pred_check_branch
      %14 = sbr.rel (0) target = $region5
    $region4: #{tpu_custom_call.1} parent=1 // pred_region
      _
    $region5: #{tpu_custom_call.1} parent=1 // pred_fallthru
      _
    // Predicated region
    $region6: #{tpu_custom_call.1} parent=1 // pred_check
      _
    $region7: #{tpu_custom_call.1} parent=1 // pred_check_branch
      %16 = sbr.rel (0) target = $region9
    $region8: #{tpu_custom_call.1} parent=1 // pred_region
      _
    $region9: #{tpu_custom_call.1} parent=1 // pred_fallthru
      _
    // Predicated region
    $region10: #{tpu_custom_call.1} parent=1 // pred_check
      _
    $region11: #{tpu_custom_call.1} parent=1 // pred_check_branch
      %18 = sbr.rel (0) target = $region13
    $region12: #{tpu_custom_call.1} parent=1 // pred_region
      _
    $region13: #{tpu_custom_call.1} parent=1 // pred_fallthru
      _
    // Predicated region
    $region14: #{tpu_custom_call.1} parent=1 // pred_check
      _
    $region15: #{tpu_custom_call.1} parent=1 // pred_check_branch
      %20 = sbr.rel (0) target = $region17
    $region16: #{tpu_custom_call.1} parent=1 // pred_region
      %s22 = ssub.s32 8192, 8192
      %23 = vsyncadd [#allocation3], %s22
      %s24 = sshll.u32 [#allocation2], 4
      %s25 = int_to_ptr.vmem [resolvable:$true] %s24
      %30 = dma.hbm_to_vmem [thread:$0]  %s3, 8192, %s25, [#allocation3], 256, 256, 16
    $region17: #{tpu_custom_call.1} parent=1 // pred_fallthru
      _
    // Predicated region
    $region18: #{tpu_custom_call.1} parent=1 // pred_check
      _
    $region19: #{tpu_custom_call.1} parent=1 // pred_check_branch
      %32 = sbr.rel (0) target = $region21
    $region20: #{tpu_custom_call.1} parent=1 // pred_region
      %s34 = ssub.s32 8192, 8192
      %35 = vsyncadd [#allocation6], %s34
      %s36 = sshll.u32 [#allocation5], 4
      %s37 = int_to_ptr.vmem [resolvable:$true] %s36
      %42 = dma.hbm_to_vmem [thread:$0]  %s4, 8192, %s37, [#allocation6], 256, 256, 16
    $region21: #{tpu_custom_call.1} parent=1 // pred_fallthru
      _
    // Predicated region
    $region22: #{tpu_custom_call.1} parent=1 // pred_check
      _
    $region23: #{tpu_custom_call.1} parent=1 // pred_check_branch
      %44 = sbr.rel (0) target = $region25
    $region24: #{tpu_custom_call.1} parent=1 // pred_region
      %45 = dma.done [#allocation3], 8192
    $region25: #{tpu_custom_call.1} parent=1 // pred_fallthru
      _
    // Predicated region
    $region26: #{tpu_custom_call.1} parent=1 // pred_check
      _
    $region27: #{tpu_custom_call.1} parent=1 // pred_check_branch
      %47 = sbr.rel (0) target = $region29
    $region28: #{tpu_custom_call.1} parent=1 // pred_region
      %48 = dma.done [#allocation6], 8192
    $region29: #{tpu_custom_call.1} parent=1 // pred_fallthru
      _
    %v49 = vld [vmem:[%s0] sm:$0xff]
    %v50 = vld [vmem:[%s0 + $0x8] sm:$0xff]
    %v51 = vld [vmem:[%s0 + $0x10] sm:$0xff]
    %v52 = vld [vmem:[%s0 + $0x18] sm:$0xff]
    %v53 = vld [vmem:[%s0 + $0x20] sm:$0xff]
    %v54 = vld [vmem:[%s0 + $0x28] sm:$0xff]
    %v55 = vld [vmem:[%s0 + $0x30] sm:$0xff]
    %v56 = vld [vmem:[%s0 + $0x38] sm:$0xff]
    %v57 = vld [vmem:[%s0 + $0x40] sm:$0xff]
    %v58 = vld [vmem:[%s0 + $0x48] sm:$0xff]
    %v59 = vld [vmem:[%s0 + $0x50] sm:$0xff]
    %v60 = vld [vmem:[%s0 + $0x58] sm:$0xff]
    %v61 = vld [vmem:[%s0 + $0x60] sm:$0xff]
    %v62 = vld [vmem:[%s0 + $0x68] sm:$0xff]
    %v63 = vld [vmem:[%s0 + $0x70] sm:$0xff]
    %v64 = vld [vmem:[%s0 + $0x78] sm:$0xff]
    %v65 = vadd.f32 %v49, %v50
    %66 = vadd.xlane.f32.xlu0 %v65
    %v67 = vpop.xlane.xlu0 %66
    %v68 = vadd.f32 %v51, %v52
    %69 = vadd.xlane.f32.xlu0 %v68
    %v70 = vpop.xlane.xlu0 %69
    %v71 = vadd.f32 %v53, %v54
    %72 = vadd.xlane.f32.xlu0 %v71
    %v73 = vpop.xlane.xlu0 %72
    %v74 = vadd.f32 %v55, %v56
    %75 = vadd.xlane.f32.xlu0 %v74
    %v76 = vpop.xlane.xlu0 %75
    %v77 = vadd.f32 %v57, %v58
    %78 = vadd.xlane.f32.xlu0 %v77
    %v79 = vpop.xlane.xlu0 %78
    %v80 = vadd.f32 %v59, %v60
    %81 = vadd.xlane.f32.xlu0 %v80
    %v82 = vpop.xlane.xlu0 %81
    %v83 = vadd.f32 %v61, %v62
    %84 = vadd.xlane.f32.xlu0 %v83
    %v85 = vpop.xlane.xlu0 %84
    %v86 = vadd.f32 %v63, %v64
    %87 = vadd.xlane.f32.xlu0 %v86
    %v88 = vpop.xlane.xlu0 %87
    %v89 = vrcp.pop 256.0
    %v90 = vmul.f32 %v67, %v89
    %v91 = vmul.f32 %v70, %v89
    %v92 = vmul.f32 %v73, %v89
    %v93 = vmul.f32 %v76, %v89
    %v94 = vmul.f32 %v79, %v89
    %v95 = vmul.f32 %v82, %v89
    %v96 = vmul.f32 %v85, %v89
    %v97 = vmul.f32 %v88, %v89
    %v98 = vmax.f32 %v49, %v50
    %99 = vmax.xlane.f32.xlu0 %v98
    %v100 = vpop.xlane.xlu0 %99
    %v101 = vmax.f32 %v51, %v52
    %102 = vmax.xlane.f32.xlu0 %v101
    %v103 = vpop.xlane.xlu0 %102
    %v104 = vmax.f32 %v53, %v54
    %105 = vmax.xlane.f32.xlu0 %v104
    %v106 = vpop.xlane.xlu0 %105
    %v107 = vmax.f32 %v55, %v56
    %108 = vmax.xlane.f32.xlu0 %v107
    %v109 = vpop.xlane.xlu0 %108
    %v110 = vmax.f32 %v57, %v58
    %111 = vmax.xlane.f32.xlu0 %v110
    %v112 = vpop.xlane.xlu0 %111
    %v113 = vmax.f32 %v59, %v60
    %114 = vmax.xlane.f32.xlu0 %v113
    %v115 = vpop.xlane.xlu0 %114
    %v116 = vmax.f32 %v61, %v62
    %117 = vmax.xlane.f32.xlu0 %v116
    %v118 = vpop.xlane.xlu0 %117
    %v119 = vmax.f32 %v63, %v64
    %120 = vmax.xlane.f32.xlu0 %v119
    %v121 = vpop.xlane.xlu0 %120
    %v122 = vld [vmem:[%s1] sm:$0xff]
    %v123 = vld [vmem:[%s1 + $0x8] sm:$0xff]
    %v124 = vld [vmem:[%s1 + $0x10] sm:$0xff]
    %v125 = vld [vmem:[%s1 + $0x18] sm:$0xff]
    %v126 = vld [vmem:[%s2] sm:$0xff]
    %v127 = vld [vmem:[%s2 + $0x8] sm:$0xff]
    %v128 = vld [vmem:[%s2 + $0x10] sm:$0xff]
    %v129 = vld [vmem:[%s2 + $0x18] sm:$0xff]
    %v130 = vld [vmem:[%s2 + $0x20] sm:$0xff]
    %v131 = vld [vmem:[%s2 + $0x28] sm:$0xff]
    %v132 = vld [vmem:[%s2 + $0x30] sm:$0xff]
    %v133 = vld [vmem:[%s2 + $0x38] sm:$0xff]
    %v134 = vld [vmem:[%s2 + $0x40] sm:$0xff]
    %v135 = vld [vmem:[%s2 + $0x48] sm:$0xff]
    %v136 = vld [vmem:[%s2 + $0x50] sm:$0xff]
    %v137 = vld [vmem:[%s2 + $0x58] sm:$0xff]
    %v138 = vld [vmem:[%s2 + $0x60] sm:$0xff]
    %v139 = vld [vmem:[%s2 + $0x68] sm:$0xff]
    %v140 = vld [vmem:[%s2 + $0x70] sm:$0xff]
    %v141 = vld [vmem:[%s2 + $0x78] sm:$0xff]
    %v150 = vlaneseq
    %v151 = vand.u32 %v150, 127
    %v152 = vlaneseq
    %v153 = vshrl.u32 %v152, 7
    %v154 = vsub.s32 %v151, %v153
    %v155 = vrot.slane %v90, %v154
    %v156 = vadd.s32 %v151, 4294967288
    %v157 = vlaneseq
    %v158 = vshrl.u32 %v157, 7
    %v159 = vsub.s32 %v156, %v158
    %v160 = vrot.slane %v91, %v159
    %vm161 = vcmask 130112
    %v162 = vsel %vm161, %v160, %v155
    %v163 = vadd.s32 %v151, 4294967280
    %v164 = vlaneseq
    %v165 = vshrl.u32 %v164, 7
    %v166 = vsub.s32 %v163, %v165
    %v167 = vrot.slane %v92, %v166
    %vm168 = vcmask 195712
    %v169 = vsel %vm168, %v167, %v162
    %v170 = vadd.s32 %v151, 4294967272
    %v171 = vlaneseq
    %v172 = vshrl.u32 %v171, 7
    %v173 = vsub.s32 %v170, %v172
    %v174 = vrot.slane %v93, %v173
    %vm175 = vcmask 261312
    %v176 = vsel %vm175, %v174, %v169
    %v177 = vlaneseq
    %v178 = vshrl.u32 %v177, 7
    %v179 = vsub.s32 %v151, %v178
    %v180 = vrot.slane %v94, %v179
    %v181 = vlaneseq
    %v182 = vshrl.u32 %v181, 7
    %v183 = vsub.s32 %v156, %v182
    %v184 = vrot.slane %v95, %v183
    %v185 = vsel %vm161, %v184, %v180
    %v186 = vlaneseq
    %v187 = vshrl.u32 %v186, 7
    %v188 = vsub.s32 %v163, %v187
    %v189 = vrot.slane %v96, %v188
    %v190 = vsel %vm168, %v189, %v185
    %v191 = vlaneseq
    %v192 = vshrl.u32 %v191, 7
    %v193 = vsub.s32 %v170, %v192
    %v194 = vrot.slane %v97, %v193
    %v195 = vsel %vm175, %v194, %v190
    %vm196 = vcmask 1041409
    %v197 = vsel %vm196, %v195, %v176
    %vm198 = vcmask 261120
    %v199 = vsel %vm198, %v197, 0
    %201 = vmatprep.subr.mxu0 0.0
    %202 = vmatpush1.msra.mxu0 0.0
    %203 = vmatprep.subr.mxu0 0.0
    %204 = vmatpush1.msra.mxu0 0.0
    %205 = vmatprep.subr.mxu0 0.0
    %206 = vmatpush1.msra.mxu0 0.0
    %207 = vmatprep.subr.mxu0 0.0
    %208 = vmatpush1.msra.mxu0 0.0
    %209 = vmatprep.subr.mxu0 0.0
    %210 = vmatpush1.msra.mxu0 0.0
    %211 = vmatprep.subr.mxu0 0.0
    %212 = vmatpush1.msra.mxu0 0.0
    %213 = vmatprep.subr.mxu0 0.0
    %214 = vmatpush1.msra.mxu0 0.0
    %215 = vmatprep.subr.mxu0 0.0
    %216 = vmatpush1.msra.mxu0 0.0
    %217 = vmatprep.subr.mxu0 0.0
    %218 = vmatpush1.msra.mxu0 0.0
    %219 = vmatprep.subr.mxu0 0.0
    %220 = vmatpush1.msra.mxu0 0.0
    %221 = vmatprep.subr.mxu0 0.0
    %222 = vmatpush1.msra.mxu0 0.0
    %223 = vmatprep.subr.mxu0 0.0
    %224 = vmatpush1.msra.mxu0 0.0
    %225 = vmatprep.subr.mxu0 0.0
    %226 = vmatpush1.msra.mxu0 %v125
    %227 = vmatprep.subr.mxu0 0.0
    %228 = vmatpush1.msra.mxu0 %v124
    %229 = vmatprep.subr.mxu0 0.0
    %230 = vmatpush1.msra.mxu0 %v123
    %231 = vmatprep.subr.mxu0 0.0
    %232 = vmatpush1.msra.mxu0 %v122
    %233 = vmatprep.subr.mxu0 0.0
    %234 = vmatpush2.msra.mxu0 0.0
    %235 = vmatprep.subr.mxu0 0.0
    %236 = vmatpush2.msra.mxu0 0.0
    %237 = vmatprep.subr.mxu0 0.0
    %238 = vmatpush2.msra.mxu0 0.0
    %239 = vmatprep.subr.mxu0 0.0
    %240 = vmatpush2.msra.mxu0 0.0
    %241 = vmatprep.subr.mxu0 0.0
    %242 = vmatpush2.msra.mxu0 0.0
    %243 = vmatprep.subr.mxu0 0.0
    %244 = vmatpush2.msra.mxu0 0.0
    %245 = vmatprep.subr.mxu0 0.0
    %246 = vmatpush2.msra.mxu0 0.0
    %247 = vmatprep.subr.mxu0 0.0
    %248 = vmatpush2.msra.mxu0 0.0
    %249 = vmatprep.subr.mxu0 0.0
    %250 = vmatpush2.msra.mxu0 0.0
    %251 = vmatprep.subr.mxu0 0.0
    %252 = vmatpush2.msra.mxu0 0.0
    %253 = vmatprep.subr.mxu0 0.0
    %254 = vmatpush2.msra.mxu0 0.0
    %255 = vmatprep.subr.mxu0 0.0
    %256 = vmatpush2.msra.mxu0 0.0
    %257 = vmatprep.subr.mxu0 0.0
    %258 = vmatpush2.msra.mxu0 0.0
    %259 = vmatprep.subr.mxu0 0.0
    %260 = vmatpush2.msra.mxu0 0.0
    %261 = vmatprep.subr.mxu0 0.0
    %262 = vmatpush2.msra.mxu0 0.0
    %263 = vmatprep.subr.mxu0 0.0
    %264 = vmatpush2.msra.mxu0 0.0
    %265 = vmatprep.mubr.f32.mxu0 0.0
    %266 = vmatmul.mubr.f32.gmra.mxu0 %v199
    %v267 = vpop.f32.mrf.mxu0
    %v268 = vadd.f32 0.0, %v267
    %v269 = vpop.f32.mrf.mxu0
    %270 = vdwg.mxu0
    %v271 = vmax.f32 %v268, 0.0
    %v280 = vlaneseq
    %v281 = vshrl.u32 %v280, 7
    %v282 = vsub.s32 %v151, %v281
    %v283 = vrot.slane %v100, %v282
    %v284 = vlaneseq
    %v285 = vshrl.u32 %v284, 7
    %v286 = vsub.s32 %v156, %v285
    %v287 = vrot.slane %v103, %v286
    %v288 = vsel %vm161, %v287, %v283
    %v289 = vlaneseq
    %v290 = vshrl.u32 %v289, 7
    %v291 = vsub.s32 %v163, %v290
    %v292 = vrot.slane %v106, %v291
    %v293 = vsel %vm168, %v292, %v288
    %v294 = vlaneseq
    %v295 = vshrl.u32 %v294, 7
    %v296 = vsub.s32 %v170, %v295
    %v297 = vrot.slane %v109, %v296
    %v298 = vsel %vm175, %v297, %v293
    %v299 = vlaneseq
    %v300 = vshrl.u32 %v299, 7
    %v301 = vsub.s32 %v151, %v300
    %v302 = vrot.slane %v112, %v301
    %v303 = vlaneseq
    %v304 = vshrl.u32 %v303, 7
    %v305 = vsub.s32 %v156, %v304
    %v306 = vrot.slane %v115, %v305
    %v307 = vsel %vm161, %v306, %v302
    %v308 = vlaneseq
    %v309 = vshrl.u32 %v308, 7
    %v310 = vsub.s32 %v163, %v309
    %v311 = vrot.slane %v118, %v310
    %v312 = vsel %vm168, %v311, %v307
    %v313 = vlaneseq
    %v314 = vshrl.u32 %v313, 7
    %v315 = vsub.s32 %v170, %v314
    %v316 = vrot.slane %v121, %v315
    %v317 = vsel %vm175, %v316, %v312
    %v318 = vsel %vm196, %v317, %v298
    %v319 = vsel %vm198, %v318, 0
    %321 = vmatprep.subr.mxu0 0.0
    %322 = vmatpush1.msra.mxu0 0.0
    %323 = vmatprep.subr.mxu0 0.0
    %324 = vmatpush1.msra.mxu0 0.0
    %325 = vmatprep.subr.mxu0 0.0
    %326 = vmatpush1.msra.mxu0 0.0
    %327 = vmatprep.subr.mxu0 0.0
    %328 = vmatpush1.msra.mxu0 0.0
    %329 = vmatprep.subr.mxu0 0.0
    %330 = vmatpush1.msra.mxu0 0.0
    %331 = vmatprep.subr.mxu0 0.0
    %332 = vmatpush1.msra.mxu0 0.0
    %333 = vmatprep.subr.mxu0 0.0
    %334 = vmatpush1.msra.mxu0 0.0
    %335 = vmatprep.subr.mxu0 0.0
    %336 = vmatpush1.msra.mxu0 0.0
    %337 = vmatprep.subr.mxu0 0.0
    %338 = vmatpush1.msra.mxu0 0.0
    %339 = vmatprep.subr.mxu0 0.0
    %340 = vmatpush1.msra.mxu0 0.0
    %341 = vmatprep.subr.mxu0 0.0
    %342 = vmatpush1.msra.mxu0 0.0
    %343 = vmatprep.subr.mxu0 0.0
    %344 = vmatpush1.msra.mxu0 0.0
    %345 = vmatprep.subr.mxu0 0.0
    %346 = vmatpush1.msra.mxu0 %v125
    %347 = vmatprep.subr.mxu0 0.0
    %348 = vmatpush1.msra.mxu0 %v124
    %349 = vmatprep.subr.mxu0 0.0
    %350 = vmatpush1.msra.mxu0 %v123
    %351 = vmatprep.subr.mxu0 0.0
    %352 = vmatpush1.msra.mxu0 %v122
    %353 = vmatprep.subr.mxu0 0.0
    %354 = vmatpush2.msra.mxu0 0.0
    %355 = vmatprep.subr.mxu0 0.0
    %356 = vmatpush2.msra.mxu0 0.0
    %357 = vmatprep.subr.mxu0 0.0
    %358 = vmatpush2.msra.mxu0 0.0
    %359 = vmatprep.subr.mxu0 0.0
    %360 = vmatpush2.msra.mxu0 0.0
    %361 = vmatprep.subr.mxu0 0.0
    %362 = vmatpush2.msra.mxu0 0.0
    %363 = vmatprep.subr.mxu0 0.0
    %364 = vmatpush2.msra.mxu0 0.0
    %365 = vmatprep.subr.mxu0 0.0
    %366 = vmatpush2.msra.mxu0 0.0
    %367 = vmatprep.subr.mxu0 0.0
    %368 = vmatpush2.msra.mxu0 0.0
    %369 = vmatprep.subr.mxu0 0.0
    %370 = vmatpush2.msra.mxu0 0.0
    %371 = vmatprep.subr.mxu0 0.0
    %372 = vmatpush2.msra.mxu0 0.0
    %373 = vmatprep.subr.mxu0 0.0
    %374 = vmatpush2.msra.mxu0 0.0
    %375 = vmatprep.subr.mxu0 0.0
    %376 = vmatpush2.msra.mxu0 0.0
    %377 = vmatprep.subr.mxu0 0.0
    %378 = vmatpush2.msra.mxu0 0.0
    %379 = vmatprep.subr.mxu0 0.0
    %380 = vmatpush2.msra.mxu0 0.0
    %381 = vmatprep.subr.mxu0 0.0
    %382 = vmatpush2.msra.mxu0 0.0
    %383 = vmatprep.subr.mxu0 0.0
    %384 = vmatpush2.msra.mxu0 0.0
    %385 = vmatprep.mubr.f32.mxu0 0.0
    %386 = vmatmul.mubr.f32.gmra.mxu0 %v319
    %v387 = vpop.f32.mrf.mxu0
    %v388 = vadd.f32 0.0, %v387
    %v389 = vpop.f32.mrf.mxu0
    %390 = vdwg.mxu0
    %v391 = vmax.f32 %v388, 0.0
    %392 = vmatprep.subr.mxu0 0.0
    %393 = vmatpush1.msra.mxu0 %v141
    %394 = vmatprep.subr.mxu0 0.0
    %395 = vmatpush1.msra.mxu0 %v140
    %396 = vmatprep.subr.mxu0 0.0
    %397 = vmatpush1.msra.mxu0 %v139
    %398 = vmatprep.subr.mxu0 0.0
    %399 = vmatpush1.msra.mxu0 %v138
    %400 = vmatprep.subr.mxu0 0.0
    %401 = vmatpush1.msra.mxu0 %v137
    %402 = vmatprep.subr.mxu0 0.0
    %403 = vmatpush1.msra.mxu0 %v136
    %404 = vmatprep.subr.mxu0 0.0
    %405 = vmatpush1.msra.mxu0 %v135
    %406 = vmatprep.subr.mxu0 0.0
    %407 = vmatpush1.msra.mxu0 %v134
    %408 = vmatprep.subr.mxu0 0.0
    %409 = vmatpush1.msra.mxu0 %v133
    %410 = vmatprep.subr.mxu0 0.0
    %411 = vmatpush1.msra.mxu0 %v132
    %412 = vmatprep.subr.mxu0 0.0
    %413 = vmatpush1.msra.mxu0 %v131
    %414 = vmatprep.subr.mxu0 0.0
    %415 = vmatpush1.msra.mxu0 %v130
    %416 = vmatprep.subr.mxu0 0.0
    %417 = vmatpush1.msra.mxu0 %v129
    %418 = vmatprep.subr.mxu0 0.0
    %419 = vmatpush1.msra.mxu0 %v128
    %420 = vmatprep.subr.mxu0 0.0
    %421 = vmatpush1.msra.mxu0 %v127
    %422 = vmatprep.subr.mxu0 0.0
    %423 = vmatpush1.msra.mxu0 %v126
    %424 = vmatprep.subr.mxu0 0.0
    %425 = vmatpush2.msra.mxu0 0.0
    %426 = vmatprep.subr.mxu0 0.0
    %427 = vmatpush2.msra.mxu0 0.0
    %428 = vmatprep.subr.mxu0 0.0
    %429 = vmatpush2.msra.mxu0 0.0
    %430 = vmatprep.subr.mxu0 0.0
    %431 = vmatpush2.msra.mxu0 0.0
    %432 = vmatprep.subr.mxu0 0.0
    %433 = vmatpush2.msra.mxu0 0.0
    %434 = vmatprep.subr.mxu0 0.0
    %435 = vmatpush2.msra.mxu0 0.0
    %436 = vmatprep.subr.mxu0 0.0
    %437 = vmatpush2.msra.mxu0 0.0
    %438 = vmatprep.subr.mxu0 0.0
    %439 = vmatpush2.msra.mxu0 0.0
    %440 = vmatprep.subr.mxu0 0.0
    %441 = vmatpush2.msra.mxu0 0.0
    %442 = vmatprep.subr.mxu0 0.0
    %443 = vmatpush2.msra.mxu0 0.0
    %444 = vmatprep.subr.mxu0 0.0
    %445 = vmatpush2.msra.mxu0 0.0
    %446 = vmatprep.subr.mxu0 0.0
    %447 = vmatpush2.msra.mxu0 0.0
    %448 = vmatprep.subr.mxu0 0.0
    %449 = vmatpush2.msra.mxu0 0.0
    %450 = vmatprep.subr.mxu0 0.0
    %451 = vmatpush2.msra.mxu0 0.0
    %452 = vmatprep.subr.mxu0 0.0
    %453 = vmatpush2.msra.mxu0 0.0
    %454 = vmatprep.subr.mxu0 0.0
    %455 = vmatpush2.msra.mxu0 0.0
    %456 = vmatprep.mubr.f32.mxu0 0.0
    %457 = vmatmul.mubr.f32.gmra.mxu0 %v391
    %v458 = vpop.f32.mrf.mxu0
    %v459 = vadd.f32 0.0, %v458
    %v460 = vpop.f32.mrf.mxu0
    %461 = vdwg.mxu0
    %462 = vmatprep.subr.mxu0 0.0
    %463 = vmatpush1.msra.mxu0 %v141
    %464 = vmatprep.subr.mxu0 0.0
    %465 = vmatpush1.msra.mxu0 %v140
    %466 = vmatprep.subr.mxu0 0.0
    %467 = vmatpush1.msra.mxu0 %v139
    %468 = vmatprep.subr.mxu0 0.0
    %469 = vmatpush1.msra.mxu0 %v138
    %470 = vmatprep.subr.mxu0 0.0
    %471 = vmatpush1.msra.mxu0 %v137
    %472 = vmatprep.subr.mxu0 0.0
    %473 = vmatpush1.msra.mxu0 %v136
    %474 = vmatprep.subr.mxu0 0.0
    %475 = vmatpush1.msra.mxu0 %v135
    %476 = vmatprep.subr.mxu0 0.0
    %477 = vmatpush1.msra.mxu0 %v134
    %478 = vmatprep.subr.mxu0 0.0
    %479 = vmatpush1.msra.mxu0 %v133
    %480 = vmatprep.subr.mxu0 0.0
    %481 = vmatpush1.msra.mxu0 %v132
    %482 = vmatprep.subr.mxu0 0.0
    %483 = vmatpush1.msra.mxu0 %v131
    %484 = vmatprep.subr.mxu0 0.0
    %485 = vmatpush1.msra.mxu0 %v130
    %486 = vmatprep.subr.mxu0 0.0
    %487 = vmatpush1.msra.mxu0 %v129
    %488 = vmatprep.subr.mxu0 0.0
    %489 = vmatpush1.msra.mxu0 %v128
    %490 = vmatprep.subr.mxu0 0.0
    %491 = vmatpush1.msra.mxu0 %v127
    %492 = vmatprep.subr.mxu0 0.0
    %493 = vmatpush1.msra.mxu0 %v126
    %494 = vmatprep.subr.mxu0 0.0
    %495 = vmatpush2.msra.mxu0 0.0
    %496 = vmatprep.subr.mxu0 0.0
    %497 = vmatpush2.msra.mxu0 0.0
    %498 = vmatprep.subr.mxu0 0.0
    %499 = vmatpush2.msra.mxu0 0.0
    %500 = vmatprep.subr.mxu0 0.0
    %501 = vmatpush2.msra.mxu0 0.0
    %502 = vmatprep.subr.mxu0 0.0
    %503 = vmatpush2.msra.mxu0 0.0
    %504 = vmatprep.subr.mxu0 0.0
    %505 = vmatpush2.msra.mxu0 0.0
    %506 = vmatprep.subr.mxu0 0.0
    %507 = vmatpush2.msra.mxu0 0.0
    %508 = vmatprep.subr.mxu0 0.0
    %509 = vmatpush2.msra.mxu0 0.0
    %510 = vmatprep.subr.mxu0 0.0
    %511 = vmatpush2.msra.mxu0 0.0
    %512 = vmatprep.subr.mxu0 0.0
    %513 = vmatpush2.msra.mxu0 0.0
    %514 = vmatprep.subr.mxu0 0.0
    %515 = vmatpush2.msra.mxu0 0.0
    %516 = vmatprep.subr.mxu0 0.0
    %517 = vmatpush2.msra.mxu0 0.0
    %518 = vmatprep.subr.mxu0 0.0
    %519 = vmatpush2.msra.mxu0 0.0
    %520 = vmatprep.subr.mxu0 0.0
    %521 = vmatpush2.msra.mxu0 0.0
    %522 = vmatprep.subr.mxu0 0.0
    %523 = vmatpush2.msra.mxu0 0.0
    %524 = vmatprep.subr.mxu0 0.0
    %525 = vmatpush2.msra.mxu0 0.0
    %526 = vmatprep.mubr.f32.mxu0 0.0
    %527 = vmatmul.mubr.f32.gmra.mxu0 %v271
    %v528 = vpop.f32.mrf.mxu0
    %v529 = vadd.f32 %v459, %v528
    %v530 = vpop.f32.mrf.mxu0
    %531 = vdwg.mxu0
    %v532 = vxor.u32 %v529, 2147483648
    %v533 = vmul.f32 %v532, 1.442695
    %v534 = vpow.pop %v533
    %v535 = vadd.f32 %v534, 1.0
    %v536 = vrcp.pop %v535
    %v537 = vmul.f32 1.0, %v536
    %v538 = vlaneseq
    %v539 = vshrl.u32 %v538, 7
    %v540 = vsub.s32 0, %v539
    %v541 = vrot.slane %v537, %v540
    %543 = vbcast.lane.b32.xlu0 %v541, 256
    %v544 = vpop.permute.xlu0 %543
    %s546 = sor.u32 256, 8
    %547 = vbcast.lane.b32.xlu0 %v541, %s546
    %v548 = vpop.permute.xlu0 %547
    %s550 = sor.u32 256, 16
    %551 = vbcast.lane.b32.xlu0 %v541, %s550
    %v552 = vpop.permute.xlu0 %551
    %s554 = sor.u32 256, 24
    %555 = vbcast.lane.b32.xlu0 %v541, %s554
    %v556 = vpop.permute.xlu0 %555
    %v557 = vlaneseq
    %v558 = vshrl.u32 %v557, 7
    %v559 = vsub.s32 1, %v558
    %v560 = vrot.slane %v537, %v559
    %562 = vbcast.lane.b32.xlu0 %v560, 256
    %v563 = vpop.permute.xlu0 %562
    %s565 = sor.u32 256, 8
    %566 = vbcast.lane.b32.xlu0 %v560, %s565
    %v567 = vpop.permute.xlu0 %566
    %s569 = sor.u32 256, 16
    %570 = vbcast.lane.b32.xlu0 %v560, %s569
    %v571 = vpop.permute.xlu0 %570
    %s573 = sor.u32 256, 24
    %574 = vbcast.lane.b32.xlu0 %v560, %s573
    %v575 = vpop.permute.xlu0 %574
    %v576 = vmul.f32 %v49, %v544
    %v577 = vmul.f32 %v50, %v544
    %v578 = vmul.f32 %v51, %v548
    %v579 = vmul.f32 %v52, %v548
    %v580 = vmul.f32 %v53, %v552
    %v581 = vmul.f32 %v54, %v552
    %v582 = vmul.f32 %v55, %v556
    %v583 = vmul.f32 %v56, %v556
    %v584 = vmul.f32 %v57, %v563
    %v585 = vmul.f32 %v58, %v563
    %v586 = vmul.f32 %v59, %v567
    %v587 = vmul.f32 %v60, %v567
    %v588 = vmul.f32 %v61, %v571
    %v589 = vmul.f32 %v62, %v571
    %v590 = vmul.f32 %v63, %v575
    %v591 = vmul.f32 %v64, %v575
    %v592 = vadd.f32 %v576, %v578
    %v593 = vadd.f32 %v592, %v580
    %v594 = vadd.f32 %v593, %v582
    %v595 = vrot.slane %v594, 4
    %v596 = vadd.f32 %v594, %v595
    %v597 = vrot.slane %v596, 2
    %v598 = vadd.f32 %v596, %v597
    %v599 = vrot.slane %v598, 1
    %v600 = vadd.f32 %v598, %v599
    %v601 = vadd.f32 %v577, %v579
    %v602 = vadd.f32 %v601, %v581
    %v603 = vadd.f32 %v602, %v583
    %v604 = vrot.slane %v603, 4
    %v605 = vadd.f32 %v603, %v604
    %v606 = vrot.slane %v605, 2
    %v607 = vadd.f32 %v605, %v606
    %v608 = vrot.slane %v607, 1
    %v609 = vadd.f32 %v607, %v608
    %v610 = vadd.f32 %v584, %v586
    %v611 = vadd.f32 %v610, %v588
    %v612 = vadd.f32 %v611, %v590
    %v613 = vrot.slane %v612, 4
    %v614 = vadd.f32 %v612, %v613
    %v615 = vrot.slane %v614, 2
    %v616 = vadd.f32 %v614, %v615
    %v617 = vrot.slane %v616, 1
    %v618 = vadd.f32 %v616, %v617
    %v619 = vadd.f32 %v585, %v587
    %v620 = vadd.f32 %v619, %v589
    %v621 = vadd.f32 %v620, %v591
    %v622 = vrot.slane %v621, 4
    %v623 = vadd.f32 %v621, %v622
    %v624 = vrot.slane %v623, 2
    %v625 = vadd.f32 %v623, %v624
    %v626 = vrot.slane %v625, 1
    %v627 = vadd.f32 %v625, %v626
    %v628 = vrcp.pop 32.0
    %v629 = vmul.f32 %v600, %v628
    %v630 = vmul.f32 %v609, %v628
    %v631 = vmul.f32 %v618, %v628
    %v632 = vmul.f32 %v627, %v628
    %v633 = vmax.f32 %v576, %v578
    %v634 = vmax.f32 %v633, %v580
    %v635 = vmax.f32 %v634, %v582
    %v636 = vrot.slane %v635, 4
    %v637 = vmax.f32 %v635, %v636
    %v638 = vrot.slane %v637, 2
    %v639 = vmax.f32 %v637, %v638
    %v640 = vrot.slane %v639, 1
    %v641 = vmax.f32 %v639, %v640
    %v642 = vmax.f32 %v577, %v579
    %v643 = vmax.f32 %v642, %v581
    %v644 = vmax.f32 %v643, %v583
    %v645 = vrot.slane %v644, 4
    %v646 = vmax.f32 %v644, %v645
    %v647 = vrot.slane %v646, 2
    %v648 = vmax.f32 %v646, %v647
    %v649 = vrot.slane %v648, 1
    %v650 = vmax.f32 %v648, %v649
    %v651 = vmax.f32 %v584, %v586
    %v652 = vmax.f32 %v651, %v588
    %v653 = vmax.f32 %v652, %v590
    %v654 = vrot.slane %v653, 4
    %v655 = vmax.f32 %v653, %v654
    %v656 = vrot.slane %v655, 2
    %v657 = vmax.f32 %v655, %v656
    %v658 = vrot.slane %v657, 1
    %v659 = vmax.f32 %v657, %v658
    %v660 = vmax.f32 %v585, %v587
    %v661 = vmax.f32 %v660, %v589
    %v662 = vmax.f32 %v661, %v591
    %v663 = vrot.slane %v662, 4
    %v664 = vmax.f32 %v662, %v663
    %v665 = vrot.slane %v664, 2
    %v666 = vmax.f32 %v664, %v665
    %v667 = vrot.slane %v666, 1
    %v668 = vmax.f32 %v666, %v667
    %v669 = vld [vmem:[#allocation2] sm:$0xff]
    %v670 = vld [vmem:[#allocation2 + $0x8] sm:$0xff]
    %v671 = vld [vmem:[#allocation2 + $0x10] sm:$0xff]
    %v672 = vld [vmem:[#allocation2 + $0x18] sm:$0xff]
    %v673 = vld [vmem:[#allocation2 + $0x20] sm:$0xff]
    %v674 = vld [vmem:[#allocation2 + $0x28] sm:$0xff]
    %v675 = vld [vmem:[#allocation2 + $0x30] sm:$0xff]
    %v676 = vld [vmem:[#allocation2 + $0x38] sm:$0xff]
    %v677 = vld [vmem:[#allocation2 + $0x40] sm:$0xff]
    %v678 = vld [vmem:[#allocation2 + $0x48] sm:$0xff]
    %v679 = vld [vmem:[#allocation2 + $0x50] sm:$0xff]
    %v680 = vld [vmem:[#allocation2 + $0x58] sm:$0xff]
    %v681 = vld [vmem:[#allocation2 + $0x60] sm:$0xff]
    %v682 = vld [vmem:[#allocation2 + $0x68] sm:$0xff]
    %v683 = vld [vmem:[#allocation2 + $0x70] sm:$0xff]
    %v684 = vld [vmem:[#allocation2 + $0x78] sm:$0xff]
    %v685 = vld [vmem:[#allocation2 + $0x80] sm:$0xff]
    %v686 = vld [vmem:[#allocation2 + $0x88] sm:$0xff]
    %v687 = vld [vmem:[#allocation2 + $0x90] sm:$0xff]
    %v688 = vld [vmem:[#allocation2 + $0x98] sm:$0xff]
    %v689 = vld [vmem:[#allocation2 + $0xa0] sm:$0xff]
    %v690 = vld [vmem:[#allocation2 + $0xa8] sm:$0xff]
    %v691 = vld [vmem:[#allocation2 + $0xb0] sm:$0xff]
    %v692 = vld [vmem:[#allocation2 + $0xb8] sm:$0xff]
    %v693 = vld [vmem:[#allocation2 + $0xc0] sm:$0xff]
    %v694 = vld [vmem:[#allocation2 + $0xc8] sm:$0xff]
    %v695 = vld [vmem:[#allocation2 + $0xd0] sm:$0xff]
    %v696 = vld [vmem:[#allocation2 + $0xd8] sm:$0xff]
    %v697 = vld [vmem:[#allocation2 + $0xe0] sm:$0xff]
    %v698 = vld [vmem:[#allocation2 + $0xe8] sm:$0xff]
    %v699 = vld [vmem:[#allocation2 + $0xf0] sm:$0xff]
    %v700 = vld [vmem:[#allocation2 + $0xf8] sm:$0xff]
    %v701 = vld [vmem:[#allocation2 + $0x100] sm:$0xff]
    %v702 = vld [vmem:[#allocation2 + $0x108] sm:$0xff]
    %v703 = vld [vmem:[#allocation2 + $0x110] sm:$0xff]
    %v704 = vld [vmem:[#allocation2 + $0x118] sm:$0xff]
    %v705 = vld [vmem:[#allocation2 + $0x120] sm:$0xff]
    %v706 = vld [vmem:[#allocation2 + $0x128] sm:$0xff]
    %v707 = vld [vmem:[#allocation2 + $0x130] sm:$0xff]
    %v708 = vld [vmem:[#allocation2 + $0x138] sm:$0xff]
    %v709 = vld [vmem:[#allocation2 + $0x140] sm:$0xff]
    %v710 = vld [vmem:[#allocation2 + $0x148] sm:$0xff]
    %v711 = vld [vmem:[#allocation2 + $0x150] sm:$0xff]
    %v712 = vld [vmem:[#allocation2 + $0x158] sm:$0xff]
    %v713 = vld [vmem:[#allocation2 + $0x160] sm:$0xff]
    %v714 = vld [vmem:[#allocation2 + $0x168] sm:$0xff]
    %v715 = vld [vmem:[#allocation2 + $0x170] sm:$0xff]
    %v716 = vld [vmem:[#allocation2 + $0x178] sm:$0xff]
    %v717 = vld [vmem:[#allocation2 + $0x180] sm:$0xff]
    %v718 = vld [vmem:[#allocation2 + $0x188] sm:$0xff]
    %v719 = vld [vmem:[#allocation2 + $0x190] sm:$0xff]
    %v720 = vld [vmem:[#allocation2 + $0x198] sm:$0xff]
    %v721 = vld [vmem:[#allocation2 + $0x1a0] sm:$0xff]
    %v722 = vld [vmem:[#allocation2 + $0x1a8] sm:$0xff]
    %v723 = vld [vmem:[#allocation2 + $0x1b0] sm:$0xff]
    %v724 = vld [vmem:[#allocation2 + $0x1b8] sm:$0xff]
    %v725 = vld [vmem:[#allocation2 + $0x1c0] sm:$0xff]
    %v726 = vld [vmem:[#allocation2 + $0x1c8] sm:$0xff]
    %v727 = vld [vmem:[#allocation2 + $0x1d0] sm:$0xff]
    %v728 = vld [vmem:[#allocation2 + $0x1d8] sm:$0xff]
    %v729 = vld [vmem:[#allocation2 + $0x1e0] sm:$0xff]
    %v730 = vld [vmem:[#allocation2 + $0x1e8] sm:$0xff]
    %v731 = vld [vmem:[#allocation2 + $0x1f0] sm:$0xff]
    %v732 = vld [vmem:[#allocation2 + $0x1f8] sm:$0xff]
    %v733 = vld [vmem:[#allocation5] sm:$0xff]
    %v734 = vld [vmem:[#allocation5 + $0x8] sm:$0xff]
    %v735 = vld [vmem:[#allocation5 + $0x10] sm:$0xff]
    %v736 = vld [vmem:[#allocation5 + $0x18] sm:$0xff]
    %v737 = vld [vmem:[#allocation5 + $0x20] sm:$0xff]
    %v738 = vld [vmem:[#allocation5 + $0x28] sm:$0xff]
    %v739 = vld [vmem:[#allocation5 + $0x30] sm:$0xff]
    %v740 = vld [vmem:[#allocation5 + $0x38] sm:$0xff]
    %v741 = vld [vmem:[#allocation5 + $0x40] sm:$0xff]
    %v742 = vld [vmem:[#allocation5 + $0x48] sm:$0xff]
    %v743 = vld [vmem:[#allocation5 + $0x50] sm:$0xff]
    %v744 = vld [vmem:[#allocation5 + $0x58] sm:$0xff]
    %v745 = vld [vmem:[#allocation5 + $0x60] sm:$0xff]
    %v746 = vld [vmem:[#allocation5 + $0x68] sm:$0xff]
    %v747 = vld [vmem:[#allocation5 + $0x70] sm:$0xff]
    %v748 = vld [vmem:[#allocation5 + $0x78] sm:$0xff]
    %v749 = vld [vmem:[#allocation5 + $0x80] sm:$0xff]
    %v750 = vld [vmem:[#allocation5 + $0x88] sm:$0xff]
    %v751 = vld [vmem:[#allocation5 + $0x90] sm:$0xff]
    %v752 = vld [vmem:[#allocation5 + $0x98] sm:$0xff]
    %v753 = vld [vmem:[#allocation5 + $0xa0] sm:$0xff]
    %v754 = vld [vmem:[#allocation5 + $0xa8] sm:$0xff]
    %v755 = vld [vmem:[#allocation5 + $0xb0] sm:$0xff]
    %v756 = vld [vmem:[#allocation5 + $0xb8] sm:$0xff]
    %v757 = vld [vmem:[#allocation5 + $0xc0] sm:$0xff]
    %v758 = vld [vmem:[#allocation5 + $0xc8] sm:$0xff]
    %v759 = vld [vmem:[#allocation5 + $0xd0] sm:$0xff]
    %v760 = vld [vmem:[#allocation5 + $0xd8] sm:$0xff]
    %v761 = vld [vmem:[#allocation5 + $0xe0] sm:$0xff]
    %v762 = vld [vmem:[#allocation5 + $0xe8] sm:$0xff]
    %v763 = vld [vmem:[#allocation5 + $0xf0] sm:$0xff]
    %v764 = vld [vmem:[#allocation5 + $0xf8] sm:$0xff]
    %v765 = vld [vmem:[#allocation5 + $0x100] sm:$0xff]
    %v766 = vld [vmem:[#allocation5 + $0x108] sm:$0xff]
    %v767 = vld [vmem:[#allocation5 + $0x110] sm:$0xff]
    %v768 = vld [vmem:[#allocation5 + $0x118] sm:$0xff]
    %v769 = vld [vmem:[#allocation5 + $0x120] sm:$0xff]
    %v770 = vld [vmem:[#allocation5 + $0x128] sm:$0xff]
    %v771 = vld [vmem:[#allocation5 + $0x130] sm:$0xff]
    %v772 = vld [vmem:[#allocation5 + $0x138] sm:$0xff]
    %v773 = vld [vmem:[#allocation5 + $0x140] sm:$0xff]
    %v774 = vld [vmem:[#allocation5 + $0x148] sm:$0xff]
    %v775 = vld [vmem:[#allocation5 + $0x150] sm:$0xff]
    %v776 = vld [vmem:[#allocation5 + $0x158] sm:$0xff]
    %v777 = vld [vmem:[#allocation5 + $0x160] sm:$0xff]
    %v778 = vld [vmem:[#allocation5 + $0x168] sm:$0xff]
    %v779 = vld [vmem:[#allocation5 + $0x170] sm:$0xff]
    %v780 = vld [vmem:[#allocation5 + $0x178] sm:$0xff]
    %v781 = vld [vmem:[#allocation5 + $0x180] sm:$0xff]
    %v782 = vld [vmem:[#allocation5 + $0x188] sm:$0xff]
    %v783 = vld [vmem:[#allocation5 + $0x190] sm:$0xff]
    %v784 = vld [vmem:[#allocation5 + $0x198] sm:$0xff]
    %v785 = vld [vmem:[#allocation5 + $0x1a0] sm:$0xff]
    %v786 = vld [vmem:[#allocation5 + $0x1a8] sm:$0xff]
    %v787 = vld [vmem:[#allocation5 + $0x1b0] sm:$0xff]
    %v788 = vld [vmem:[#allocation5 + $0x1b8] sm:$0xff]
    %v789 = vld [vmem:[#allocation5 + $0x1c0] sm:$0xff]
    %v790 = vld [vmem:[#allocation5 + $0x1c8] sm:$0xff]
    %v791 = vld [vmem:[#allocation5 + $0x1d0] sm:$0xff]
    %v792 = vld [vmem:[#allocation5 + $0x1d8] sm:$0xff]
    %v793 = vld [vmem:[#allocation5 + $0x1e0] sm:$0xff]
    %v794 = vld [vmem:[#allocation5 + $0x1e8] sm:$0xff]
    %v795 = vld [vmem:[#allocation5 + $0x1f0] sm:$0xff]
    %v796 = vld [vmem:[#allocation5 + $0x1f8] sm:$0xff]
    %v801 = vsel %vm196, %v659, %v641
    %v802 = vsel %vm196, %v668, %v650
    %805 = vmatprep.subr.mxu0 %v764
    %806 = vmatpush1.msra.mxu0 %v763
    %807 = vmatprep.subr.mxu0 %v762
    %808 = vmatpush1.msra.mxu0 %v761
    %809 = vmatprep.subr.mxu0 %v760
    %810 = vmatpush1.msra.mxu0 %v759
    %811 = vmatprep.subr.mxu0 %v758
    %812 = vmatpush1.msra.mxu0 %v757
    %813 = vmatprep.subr.mxu0 %v756
    %814 = vmatpush1.msra.mxu0 %v755
    %815 = vmatprep.subr.mxu0 %v754
    %816 = vmatpush1.msra.mxu0 %v753
    %817 = vmatprep.subr.mxu0 %v752
    %818 = vmatpush1.msra.mxu0 %v751
    %819 = vmatprep.subr.mxu0 %v750
    %820 = vmatpush1.msra.mxu0 %v749
    %821 = vmatprep.subr.mxu0 %v748
    %822 = vmatpush1.msra.mxu0 %v747
    %823 = vmatprep.subr.mxu0 %v746
    %824 = vmatpush1.msra.mxu0 %v745
    %825 = vmatprep.subr.mxu0 %v744
    %826 = vmatpush1.msra.mxu0 %v743
    %827 = vmatprep.subr.mxu0 %v742
    %828 = vmatpush1.msra.mxu0 %v741
    %829 = vmatprep.subr.mxu0 %v740
    %830 = vmatpush1.msra.mxu0 %v739
    %831 = vmatprep.subr.mxu0 %v738
    %832 = vmatpush1.msra.mxu0 %v737
    %833 = vmatprep.subr.mxu0 %v736
    %834 = vmatpush1.msra.mxu0 %v735
    %835 = vmatprep.subr.mxu0 %v734
    %836 = vmatpush1.msra.mxu0 %v733
    %837 = vmatprep.subr.mxu0 %v796
    %838 = vmatpush2.msra.mxu0 %v795
    %839 = vmatprep.subr.mxu0 %v794
    %840 = vmatpush2.msra.mxu0 %v793
    %841 = vmatprep.subr.mxu0 %v792
    %842 = vmatpush2.msra.mxu0 %v791
    %843 = vmatprep.subr.mxu0 %v790
    %844 = vmatpush2.msra.mxu0 %v789
    %845 = vmatprep.subr.mxu0 %v788
    %846 = vmatpush2.msra.mxu0 %v787
    %847 = vmatprep.subr.mxu0 %v786
    %848 = vmatpush2.msra.mxu0 %v785
    %849 = vmatprep.subr.mxu0 %v784
    %850 = vmatpush2.msra.mxu0 %v783
    %851 = vmatprep.subr.mxu0 %v782
    %852 = vmatpush2.msra.mxu0 %v781
    %853 = vmatprep.subr.mxu0 %v780
    %854 = vmatpush2.msra.mxu0 %v779
    %855 = vmatprep.subr.mxu0 %v778
    %856 = vmatpush2.msra.mxu0 %v777
    %857 = vmatprep.subr.mxu0 %v776
    %858 = vmatpush2.msra.mxu0 %v775
    %859 = vmatprep.subr.mxu0 %v774
    %860 = vmatpush2.msra.mxu0 %v773
    %861 = vmatprep.subr.mxu0 %v772
    %862 = vmatpush2.msra.mxu0 %v771
    %863 = vmatprep.subr.mxu0 %v770
    %864 = vmatpush2.msra.mxu0 %v769
    %865 = vmatprep.subr.mxu0 %v768
    %866 = vmatpush2.msra.mxu0 %v767
    %867 = vmatprep.subr.mxu0 %v766
    %868 = vmatpush2.msra.mxu0 %v765
    %869 = vmatprep.mubr.f32.mxu0 %v802
    %870 = vmatmul.mubr.f32.gmra.mxu0 %v801
    %v871 = vpop.f32.mrf.mxu0
    %v872 = vadd.f32 0.0, %v871
    %v873 = vpop.f32.mrf.mxu0
    %v874 = vadd.f32 0.0, %v873
    %875 = vdwg.mxu0
    %v880 = vsel %vm196, %v631, %v629
    %v881 = vsel %vm196, %v632, %v630
    %884 = vmatprep.subr.mxu0 %v700
    %885 = vmatpush1.msra.mxu0 %v699
    %886 = vmatprep.subr.mxu0 %v698
    %887 = vmatpush1.msra.mxu0 %v697
    %888 = vmatprep.subr.mxu0 %v696
    %889 = vmatpush1.msra.mxu0 %v695
    %890 = vmatprep.subr.mxu0 %v694
    %891 = vmatpush1.msra.mxu0 %v693
    %892 = vmatprep.subr.mxu0 %v692
    %893 = vmatpush1.msra.mxu0 %v691
    %894 = vmatprep.subr.mxu0 %v690
    %895 = vmatpush1.msra.mxu0 %v689
    %896 = vmatprep.subr.mxu0 %v688
    %897 = vmatpush1.msra.mxu0 %v687
    %898 = vmatprep.subr.mxu0 %v686
    %899 = vmatpush1.msra.mxu0 %v685
    %900 = vmatprep.subr.mxu0 %v684
    %901 = vmatpush1.msra.mxu0 %v683
    %902 = vmatprep.subr.mxu0 %v682
    %903 = vmatpush1.msra.mxu0 %v681
    %904 = vmatprep.subr.mxu0 %v680
    %905 = vmatpush1.msra.mxu0 %v679
    %906 = vmatprep.subr.mxu0 %v678
    %907 = vmatpush1.msra.mxu0 %v677
    %908 = vmatprep.subr.mxu0 %v676
    %909 = vmatpush1.msra.mxu0 %v675
    %910 = vmatprep.subr.mxu0 %v674
    %911 = vmatpush1.msra.mxu0 %v673
    %912 = vmatprep.subr.mxu0 %v672
    %913 = vmatpush1.msra.mxu0 %v671
    %914 = vmatprep.subr.mxu0 %v670
    %915 = vmatpush1.msra.mxu0 %v669
    %916 = vmatprep.subr.mxu0 %v732
    %917 = vmatpush2.msra.mxu0 %v731
    %918 = vmatprep.subr.mxu0 %v730
    %919 = vmatpush2.msra.mxu0 %v729
    %920 = vmatprep.subr.mxu0 %v728
    %921 = vmatpush2.msra.mxu0 %v727
    %922 = vmatprep.subr.mxu0 %v726
    %923 = vmatpush2.msra.mxu0 %v725
    %924 = vmatprep.subr.mxu0 %v724
    %925 = vmatpush2.msra.mxu0 %v723
    %926 = vmatprep.subr.mxu0 %v722
    %927 = vmatpush2.msra.mxu0 %v721
    %928 = vmatprep.subr.mxu0 %v720
    %929 = vmatpush2.msra.mxu0 %v719
    %930 = vmatprep.subr.mxu0 %v718
    %931 = vmatpush2.msra.mxu0 %v717
    %932 = vmatprep.subr.mxu0 %v716
    %933 = vmatpush2.msra.mxu0 %v715
    %934 = vmatprep.subr.mxu0 %v714
    %935 = vmatpush2.msra.mxu0 %v713
    %936 = vmatprep.subr.mxu0 %v712
    %937 = vmatpush2.msra.mxu0 %v711
    %938 = vmatprep.subr.mxu0 %v710
    %939 = vmatpush2.msra.mxu0 %v709
    %940 = vmatprep.subr.mxu0 %v708
    %941 = vmatpush2.msra.mxu0 %v707
    %942 = vmatprep.subr.mxu0 %v706
    %943 = vmatpush2.msra.mxu0 %v705
    %944 = vmatprep.subr.mxu0 %v704
    %945 = vmatpush2.msra.mxu0 %v703
    %946 = vmatprep.subr.mxu0 %v702
    %947 = vmatpush2.msra.mxu0 %v701
    %948 = vmatprep.mubr.f32.mxu0 %v881
    %949 = vmatmul.mubr.f32.gmra.mxu0 %v880
    %v950 = vpop.f32.mrf.mxu0
    %v951 = vadd.f32 %v872, %v950
    %v952 = vpop.f32.mrf.mxu0
    %v953 = vadd.f32 %v874, %v952
    %954 = vdwg.mxu0
    %v955 = vxor.u32 %v951, 2147483648
    %v956 = vxor.u32 %v953, 2147483648
    %v957 = vmul.f32 %v955, 1.442695
    %v958 = vpow.pop %v957
    %v959 = vmul.f32 %v956, 1.442695
    %v960 = vpow.pop %v959
    %v961 = vadd.f32 %v958, 1.0
    %v962 = vadd.f32 %v960, 1.0
    %v963 = vrcp.pop %v961
    %v964 = vmul.f32 1.0, %v963
    %v965 = vrcp.pop %v962
    %v966 = vmul.f32 1.0, %v965
    %v969 = vcombine.low %v964, %v966
    %v971 = vunpack.c.l.s4 1966171168
    %v972 = vunpack.c.0.s8 %v971
    %v973 = vlaneseq
    %v974 = vshrl.u32 %v973, 7
    %v975 = vsub.s32 %v972, %v974
    %v976 = vrot.slane %v969, %v975
    %v977 = vcombine.high %v976, %v976
    %v979 = vunpack.c.l.s4 1966171168
    %v980 = vunpack.c.0.s8 %v979
    %v981 = vlaneseq
    %v982 = vshrl.u32 %v981, 7
    %v983 = vsub.s32 %v980, %v982
    %v984 = vrot.slane %v976, %v983
    %v986 = vunpack.c.l.s4 1966171168
    %v987 = vunpack.c.0.s8 %v986
    %v988 = vlaneseq
    %v989 = vshrl.u32 %v988, 7
    %v990 = vsub.s32 %v987, %v989
    %v991 = vrot.slane %v977, %v990
    %v992 = vlaneseq
    %v993 = vshrl.u32 %v992, 7
    %v994 = vsub.s32 0, %v993
    %v995 = vrot.slane %v984, %v994
    %v996 = vlaneseq
    %v997 = vshrl.u32 %v996, 7
    %v998 = vsub.s32 1, %v997
    %v999 = vrot.slane %v984, %v998
    %v1000 = vlaneseq
    %v1001 = vshrl.u32 %v1000, 7
    %v1002 = vsub.s32 0, %v1001
    %v1003 = vrot.slane %v991, %v1002
    %v1004 = vlaneseq
    %v1005 = vshrl.u32 %v1004, 7
    %v1006 = vsub.s32 1, %v1005
    %v1007 = vrot.slane %v991, %v1006
    %v1012 = vmul.f32 %v576, %v995
    %v1013 = vmul.f32 %v577, %v999
    %v1014 = vmul.f32 %v578, %v995
    %v1015 = vmul.f32 %v579, %v999
    %v1016 = vmul.f32 %v580, %v995
    %v1017 = vmul.f32 %v581, %v999
    %v1018 = vmul.f32 %v582, %v995
    %v1019 = vmul.f32 %v583, %v999
    %v1020 = vmul.f32 %v584, %v1003
    %v1021 = vmul.f32 %v585, %v1007
    %v1022 = vmul.f32 %v586, %v1003
    %v1023 = vmul.f32 %v587, %v1007
    %v1024 = vmul.f32 %v588, %v1003
    %v1025 = vmul.f32 %v589, %v1007
    %v1026 = vmul.f32 %v590, %v1003
    %v1027 = vmul.f32 %v591, %v1007
    %v1028 = vadd.f32 %v1012, %v49
    %v1029 = vadd.f32 %v1013, %v50
    %v1030 = vadd.f32 %v1014, %v51
    %v1031 = vadd.f32 %v1015, %v52
    %v1032 = vadd.f32 %v1016, %v53
    %v1033 = vadd.f32 %v1017, %v54
    %v1034 = vadd.f32 %v1018, %v55
    %v1035 = vadd.f32 %v1019, %v56
    %v1036 = vadd.f32 %v1020, %v57
    %v1037 = vadd.f32 %v1021, %v58
    %v1038 = vadd.f32 %v1022, %v59
    %v1039 = vadd.f32 %v1023, %v60
    %v1040 = vadd.f32 %v1024, %v61
    %v1041 = vadd.f32 %v1025, %v62
    %v1042 = vadd.f32 %v1026, %v63
    %v1043 = vadd.f32 %v1027, %v64
    %1044 = vst [vmem:[#allocation7] sm:$0xff] %v1028
    %1045 = vst [vmem:[#allocation7 + $0x8] sm:$0xff] %v1029
    %1046 = vst [vmem:[#allocation7 + $0x10] sm:$0xff] %v1030
    %1047 = vst [vmem:[#allocation7 + $0x18] sm:$0xff] %v1031
    %1048 = vst [vmem:[#allocation7 + $0x20] sm:$0xff] %v1032
    %1049 = vst [vmem:[#allocation7 + $0x28] sm:$0xff] %v1033
    %1050 = vst [vmem:[#allocation7 + $0x30] sm:$0xff] %v1034
    %1051 = vst [vmem:[#allocation7 + $0x38] sm:$0xff] %v1035
    %1052 = vst [vmem:[#allocation7 + $0x40] sm:$0xff] %v1036
    %1053 = vst [vmem:[#allocation7 + $0x48] sm:$0xff] %v1037
    %1054 = vst [vmem:[#allocation7 + $0x50] sm:$0xff] %v1038
    %1055 = vst [vmem:[#allocation7 + $0x58] sm:$0xff] %v1039
    %1056 = vst [vmem:[#allocation7 + $0x60] sm:$0xff] %v1040
    %1057 = vst [vmem:[#allocation7 + $0x68] sm:$0xff] %v1041
    %1058 = vst [vmem:[#allocation7 + $0x70] sm:$0xff] %v1042
    %1059 = vst [vmem:[#allocation7 + $0x78] sm:$0xff] %v1043
    // Predicated region
    $region30: #{tpu_custom_call.1} parent=1 // pred_check
      _
    $region31: #{tpu_custom_call.1} parent=1 // pred_check_branch
      %1061 = sbr.rel (0) target = $region33
    $region32: #{tpu_custom_call.1} parent=1 // pred_region
      %s1063 = ssub.s32 2048, 2048
      %1064 = vsyncadd [#allocation4], %s1063
      %s1065 = sshll.u32 [#allocation7], 4
      %s1066 = int_to_ptr.vmem [resolvable:$true] %s1065
      %1071 = dma.vmem_to_hbm [thread:$0]  %s1066, 2048, %s5, [#allocation4], 256, 256, 16
    $region33: #{tpu_custom_call.1} parent=1 // pred_fallthru
      _
    // Predicated region
    $region34: #{tpu_custom_call.1} parent=1 // pred_check
      _
    $region35: #{tpu_custom_call.1} parent=1 // pred_check_branch
      %1073 = sbr.rel (0) target = $region37
    $region36: #{tpu_custom_call.1} parent=1 // pred_region
      %1074 = dma.done [#allocation4], 2048
    $region37: #{tpu_custom_call.1} parent=1 // pred_fallthru
      _
    %1075 = vsyncpa [#allocation3], 1
    %1076 = vsyncpa [#allocation6], 1
    %1077 = vsyncpa [#allocation4], 1

// kernel: tpu_custom_call.1
$region0: #{tpu_custom_call.1}
  #allocation0 [shape = 'u32[]', space=smem, size = 0x4, offset = 0x4, fixed_abs, tag = 'smem constant byte address 0x4 - core index']
  #allocation1 [shape = 'u32[144,128]{1,0:T(1,128)}', space=vmem, size = 0x12000, scoped, tag = 'internal scratch']
  %s0 = inlined_call_operand.vmem [shape: f32[2,32,256], index: 0, kind: input, shape index: {}]
  %s1 = inlined_call_operand.vmem [shape: f32[32,128], index: 1, kind: input, shape index: {}]
  %s2 = inlined_call_operand.vmem [shape: f32[128,32], index: 2, kind: input, shape index: {}]
  %s3 = inlined_call_operand.hbm [shape: f32[256,256], index: 3, kind: input, shape index: {}]
  %s4 = inlined_call_operand.hbm [shape: f32[256,256], index: 4, kind: input, shape index: {}]
  %s5 = inlined_call_operand.hbm [shape: f32[2,32,256], index: 5, kind: output, shape index: {}]
  %s6 = sld [smem:[#allocation0]]
  $region38: #{tpu_custom_call.1} parent=0
    _
  %s8 = ssub.s32 1, %s6
  %s9 = scalar_select 0, %s8, %s6
  $region1: #{tpu_custom_call.1} parent=0
    #allocation2 [shape = 'u8[262144]{0}', space=vmem, size = 0x40000, scoped, tag = 'input window, operand 3, single buffered']
    #allocation3 [shape = 's32[1]{0}', space=sflag, size = 0x4, scoped, tag = 'scoped memory for tpu_custom_call.1']
    #allocation4 [shape = 's32[1]{0}', space=sflag, size = 0x4, scoped, tag = 'scoped memory for tpu_custom_call.1']
    #allocation5 [shape = 'u8[262144]{0}', space=vmem, size = 0x40000, scoped, tag = 'input window, operand 4, single buffered']
    #allocation6 [shape = 's32[1]{0}', space=sflag, size = 0x4, scoped, tag = 'scoped memory for tpu_custom_call.1']
    #allocation7 [shape = 'u8[65536]{0}', space=vmem, size = 0x10000, scoped, tag = 'output window, operand 0, single buffered']
    %10 = vsyncpa [#allocation3], 0
    %11 = vsyncpa [#allocation6], 0
    %12 = vsyncpa [#allocation4], 0
    // Predicated region
    $region2: #{tpu_custom_call.1} parent=1 // pred_check
      _
    $region3: #{tpu_custom_call.1} parent=1 // pred_check_branch
      %14 = sbr.rel (0) target = $region5
    $region4: #{tpu_custom_call.1} parent=1 // pred_region
      _
    $region5: #{tpu_custom_call.1} parent=1 // pred_fallthru
      _
    // Predicated region
    $region6: #{tpu_custom_call.1} parent=1 // pred_check
      _
    $region7: #{tpu_custom_call.1} parent=1 // pred_check_branch
      %16 = sbr.rel (0) target = $region9
    $region8: #{tpu_custom_call.1} parent=1 // pred_region
      _
    $region9: #{tpu_custom_call.1} parent=1 // pred_fallthru
      _
    // Predicated region
    $region10: #{tpu_custom_call.1} parent=1 // pred_check
      _
    $region11: #{tpu_custom_call.1} parent=1 // pred_check_branch
      %18 = sbr.rel (0) target = $region13
    $region12: #{tpu_custom_call.1} parent=1 // pred_region
      _
    $region13: #{tpu_custom_call.1} parent=1 // pred_fallthru
      _
    // Predicated region
    $region14: #{tpu_custom_call.1} parent=1 // pred_check
      _
    $region15: #{tpu_custom_call.1} parent=1 // pred_check_branch
      %20 = sbr.rel (0) target = $region17
    $region16: #{tpu_custom_call.1} parent=1 // pred_region
      %s22 = ssub.s32 8192, 8192
      %23 = vsyncadd [#allocation3], %s22
      %s24 = sshll.u32 [#allocation2], 4
      %s25 = int_to_ptr.vmem [resolvable:$true] %s24
      %30 = dma.hbm_to_vmem [thread:$0]  %s3, 8192, %s25, [#allocation3], 256, 256, 16
    $region17: #{tpu_custom_call.1} parent=1 // pred_fallthru
      _
    // Predicated region
    $region18: #{tpu_custom_call.1} parent=1 // pred_check
      _
    $region19: #{tpu_custom_call.1} parent=1 // pred_check_branch
      %32 = sbr.rel (0) target = $region21
    $region20: #{tpu_custom_call.1} parent=1 // pred_region
      %s34 = ssub.s32 8192, 8192
      %35 = vsyncadd [#allocation6], %s34
      %s36 = sshll.u32 [#allocation5], 4
      %s37 = int_to_ptr.vmem [resolvable:$true] %s36
      %42 = dma.hbm_to_vmem [thread:$0]  %s4, 8192, %s37, [#allocation6], 256, 256, 16
    $region21: #{tpu_custom_call.1} parent=1 // pred_fallthru
      _
    // Predicated region
    $region22: #{tpu_custom_call.1} parent=1 // pred_check
      _
    $region23: #{tpu_custom_call.1} parent=1 // pred_check_branch
      %44 = sbr.rel (0) target = $region25
    $region24: #{tpu_custom_call.1} parent=1 // pred_region
      %45 = dma.done [#allocation3], 8192
    $region25: #{tpu_custom_call.1} parent=1 // pred_fallthru
      _
    // Predicated region
    $region26: #{tpu_custom_call.1} parent=1 // pred_check
      _
    $region27: #{tpu_custom_call.1} parent=1 // pred_check_branch
      %47 = sbr.rel (0) target = $region29
    $region28: #{tpu_custom_call.1} parent=1 // pred_region
      %48 = dma.done [#allocation6], 8192
    $region29: #{tpu_custom_call.1} parent=1 // pred_fallthru
      _
    %v49 = vld [vmem:[%s0] sm:$0xff]
    %v50 = vld [vmem:[%s0 + $0x8] sm:$0xff]
    %v51 = vld [vmem:[%s0 + $0x10] sm:$0xff]
    %v52 = vld [vmem:[%s0 + $0x18] sm:$0xff]
    %v53 = vld [vmem:[%s0 + $0x20] sm:$0xff]
    %v54 = vld [vmem:[%s0 + $0x28] sm:$0xff]
    %v55 = vld [vmem:[%s0 + $0x30] sm:$0xff]
    %v56 = vld [vmem:[%s0 + $0x38] sm:$0xff]
    %v57 = vld [vmem:[%s0 + $0x40] sm:$0xff]
    %v58 = vld [vmem:[%s0 + $0x48] sm:$0xff]
    %v59 = vld [vmem:[%s0 + $0x50] sm:$0xff]
    %v60 = vld [vmem:[%s0 + $0x58] sm:$0xff]
    %v61 = vld [vmem:[%s0 + $0x60] sm:$0xff]
    %v62 = vld [vmem:[%s0 + $0x68] sm:$0xff]
    %v63 = vld [vmem:[%s0 + $0x70] sm:$0xff]
    %v64 = vld [vmem:[%s0 + $0x78] sm:$0xff]
    %v65 = vadd.f32 %v49, %v50
    %66 = vadd.xlane.f32.xlu0 %v65
    %v67 = vpop.xlane.xlu0 %66
    %v68 = vadd.f32 %v51, %v52
    %69 = vadd.xlane.f32.xlu0 %v68
    %v70 = vpop.xlane.xlu0 %69
    %v71 = vadd.f32 %v53, %v54
    %72 = vadd.xlane.f32.xlu0 %v71
    %v73 = vpop.xlane.xlu0 %72
    %v74 = vadd.f32 %v55, %v56
    %75 = vadd.xlane.f32.xlu0 %v74
    %v76 = vpop.xlane.xlu0 %75
    %v77 = vadd.f32 %v57, %v58
    %78 = vadd.xlane.f32.xlu0 %v77
    %v79 = vpop.xlane.xlu0 %78
    %v80 = vadd.f32 %v59, %v60
    %81 = vadd.xlane.f32.xlu0 %v80
    %v82 = vpop.xlane.xlu0 %81
    %v83 = vadd.f32 %v61, %v62
    %84 = vadd.xlane.f32.xlu0 %v83
    %v85 = vpop.xlane.xlu0 %84
    %v86 = vadd.f32 %v63, %v64
    %87 = vadd.xlane.f32.xlu0 %v86
    %v88 = vpop.xlane.xlu0 %87
    %v89 = vrcp.pop 256.0
    %v90 = vmul.f32 %v67, %v89
    %v91 = vmul.f32 %v70, %v89
    %v92 = vmul.f32 %v73, %v89
    %v93 = vmul.f32 %v76, %v89
    %v94 = vmul.f32 %v79, %v89
    %v95 = vmul.f32 %v82, %v89
    %v96 = vmul.f32 %v85, %v89
    %v97 = vmul.f32 %v88, %v89
    %v98 = vmax.f32 %v49, %v50
    %99 = vmax.xlane.f32.xlu0 %v98
    %v100 = vpop.xlane.xlu0 %99
    %v101 = vmax.f32 %v51, %v52
    %102 = vmax.xlane.f32.xlu0 %v101
    %v103 = vpop.xlane.xlu0 %102
    %v104 = vmax.f32 %v53, %v54
    %105 = vmax.xlane.f32.xlu0 %v104
    %v106 = vpop.xlane.xlu0 %105
    %v107 = vmax.f32 %v55, %v56
    %108 = vmax.xlane.f32.xlu0 %v107
    %v109 = vpop.xlane.xlu0 %108
    %v110 = vmax.f32 %v57, %v58
    %111 = vmax.xlane.f32.xlu0 %v110
    %v112 = vpop.xlane.xlu0 %111
    %v113 = vmax.f32 %v59, %v60
    %114 = vmax.xlane.f32.xlu0 %v113
    %v115 = vpop.xlane.xlu0 %114
    %v116 = vmax.f32 %v61, %v62
    %117 = vmax.xlane.f32.xlu0 %v116
    %v118 = vpop.xlane.xlu0 %117
    %v119 = vmax.f32 %v63, %v64
    %120 = vmax.xlane.f32.xlu0 %v119
    %v121 = vpop.xlane.xlu0 %120
    %v122 = vld [vmem:[%s1] sm:$0xff]
    %v123 = vld [vmem:[%s1 + $0x8] sm:$0xff]
    %v124 = vld [vmem:[%s1 + $0x10] sm:$0xff]
    %v125 = vld [vmem:[%s1 + $0x18] sm:$0xff]
    %v126 = vld [vmem:[%s2] sm:$0xff]
    %v127 = vld [vmem:[%s2 + $0x8] sm:$0xff]
    %v128 = vld [vmem:[%s2 + $0x10] sm:$0xff]
    %v129 = vld [vmem:[%s2 + $0x18] sm:$0xff]
    %v130 = vld [vmem:[%s2 + $0x20] sm:$0xff]
    %v131 = vld [vmem:[%s2 + $0x28] sm:$0xff]
    %v132 = vld [vmem:[%s2 + $0x30] sm:$0xff]
    %v133 = vld [vmem:[%s2 + $0x38] sm:$0xff]
    %v134 = vld [vmem:[%s2 + $0x40] sm:$0xff]
    %v135 = vld [vmem:[%s2 + $0x48] sm:$0xff]
    %v136 = vld [vmem:[%s2 + $0x50] sm:$0xff]
    %v137 = vld [vmem:[%s2 + $0x58] sm:$0xff]
    %v138 = vld [vmem:[%s2 + $0x60] sm:$0xff]
    %v139 = vld [vmem:[%s2 + $0x68] sm:$0xff]
    %v140 = vld [vmem:[%s2 + $0x70] sm:$0xff]
    %v141 = vld [vmem:[%s2 + $0x78] sm:$0xff]
    %v150 = vlaneseq
    %v151 = vand.u32 %v150, 127
    %v152 = vlaneseq
    %v153 = vshrl.u32 %v152, 7
    %v154 = vsub.s32 %v151, %v153
    %v155 = vrot.slane %v90, %v154
    %v156 = vadd.s32 %v151, 4294967288
    %v157 = vlaneseq
    %v158 = vshrl.u32 %v157, 7
    %v159 = vsub.s32 %v156, %v158
    %v160 = vrot.slane %v91, %v159
    %vm161 = vcmask 130112
    %v162 = vsel %vm161, %v160, %v155
    %v163 = vadd.s32 %v151, 4294967280
    %v164 = vlaneseq
    %v165 = vshrl.u32 %v164, 7
    %v166 = vsub.s32 %v163, %v165
    %v167 = vrot.slane %v92, %v166
    %vm168 = vcmask 195712
    %v169 = vsel %vm168, %v167, %v162
    %v170 = vadd.s32 %v151, 4294967272
    %v171 = vlaneseq
    %v172 = vshrl.u32 %v171, 7
    %v173 = vsub.s32 %v170, %v172
    %v174 = vrot.slane %v93, %v173
    %vm175 = vcmask 261312
    %v176 = vsel %vm175, %v174, %v169
    %v177 = vlaneseq
    %v178 = vshrl.u32 %v177, 7
    %v179 = vsub.s32 %v151, %v178
    %v180 = vrot.slane %v94, %v179
    %v181 = vlaneseq
    %v182 = vshrl.u32 %v181, 7
    %v183 = vsub.s32 %v156, %v182
    %v184 = vrot.slane %v95, %v183
    %v185 = vsel %vm161, %v184, %v180
    %v186 = vlaneseq
    %v187 = vshrl.u32 %v186, 7
    %v188 = vsub.s32 %v163, %v187
    %v189 = vrot.slane %v96, %v188
    %v190 = vsel %vm168, %v189, %v185
    %v191 = vlaneseq
    %v192 = vshrl.u32 %v191, 7
    %v193 = vsub.s32 %v170, %v192
    %v194 = vrot.slane %v97, %v193
    %v195 = vsel %vm175, %v194, %v190
    %vm196 = vcmask 1041409
    %v197 = vsel %vm196, %v195, %v176
    %vm198 = vcmask 261120
    %v199 = vsel %vm198, %v197, 0
    %201 = vmatprep.subr.mxu0 0.0
    %202 = vmatpush1.msra.mxu0 0.0
    %203 = vmatprep.subr.mxu0 0.0
    %204 = vmatpush1.msra.mxu0 0.0
    %205 = vmatprep.subr.mxu0 0.0
    %206 = vmatpush1.msra.mxu0 0.0
    %207 = vmatprep.subr.mxu0 0.0
    %208 = vmatpush1.msra.mxu0 0.0
    %209 = vmatprep.subr.mxu0 0.0
    %210 = vmatpush1.msra.mxu0 0.0
    %211 = vmatprep.subr.mxu0 0.0
    %212 = vmatpush1.msra.mxu0 0.0
    %213 = vmatprep.subr.mxu0 0.0
    %214 = vmatpush1.msra.mxu0 0.0
    %215 = vmatprep.subr.mxu0 0.0
    %216 = vmatpush1.msra.mxu0 0.0
    %217 = vmatprep.subr.mxu0 0.0
    %218 = vmatpush1.msra.mxu0 0.0
    %219 = vmatprep.subr.mxu0 0.0
    %220 = vmatpush1.msra.mxu0 0.0
    %221 = vmatprep.subr.mxu0 0.0
    %222 = vmatpush1.msra.mxu0 0.0
    %223 = vmatprep.subr.mxu0 0.0
    %224 = vmatpush1.msra.mxu0 0.0
    %225 = vmatprep.subr.mxu0 0.0
    %226 = vmatpush1.msra.mxu0 %v125
    %227 = vmatprep.subr.mxu0 0.0
    %228 = vmatpush1.msra.mxu0 %v124
    %229 = vmatprep.subr.mxu0 0.0
    %230 = vmatpush1.msra.mxu0 %v123
    %231 = vmatprep.subr.mxu0 0.0
    %232 = vmatpush1.msra.mxu0 %v122
    %233 = vmatprep.subr.mxu0 0.0
    %234 = vmatpush2.msra.mxu0 0.0
    %235 = vmatprep.subr.mxu0 0.0
    %236 = vmatpush2.msra.mxu0 0.0
    %237 = vmatprep.subr.mxu0 0.0
    %238 = vmatpush2.msra.mxu0 0.0
    %239 = vmatprep.subr.mxu0 0.0
    %240 = vmatpush2.msra.mxu0 0.0
    %241 = vmatprep.subr.mxu0 0.0
    %242 = vmatpush2.msra.mxu0 0.0
    %243 = vmatprep.subr.mxu0 0.0
    %244 = vmatpush2.msra.mxu0 0.0
    %245 = vmatprep.subr.mxu0 0.0
    %246 = vmatpush2.msra.mxu0 0.0
    %247 = vmatprep.subr.mxu0 0.0
    %248 = vmatpush2.msra.mxu0 0.0
    %249 = vmatprep.subr.mxu0 0.0
    %250 = vmatpush2.msra.mxu0 0.0
    %251 = vmatprep.subr.mxu0 0.0
    %252 = vmatpush2.msra.mxu0 0.0
    %253 = vmatprep.subr.mxu0 0.0
    %254 = vmatpush2.msra.mxu0 0.0
    %255 = vmatprep.subr.mxu0 0.0
    %256 = vmatpush2.msra.mxu0 0.0
    %257 = vmatprep.subr.mxu0 0.0
    %258 = vmatpush2.msra.mxu0 0.0
    %259 = vmatprep.subr.mxu0 0.0
    %260 = vmatpush2.msra.mxu0 0.0
    %261 = vmatprep.subr.mxu0 0.0
    %262 = vmatpush2.msra.mxu0 0.0
    %263 = vmatprep.subr.mxu0 0.0
    %264 = vmatpush2.msra.mxu0 0.0
    %265 = vmatprep.mubr.f32.mxu0 0.0
    %266 = vmatmul.mubr.f32.gmra.mxu0 %v199
    %v267 = vpop.f32.mrf.mxu0
    %v268 = vadd.f32 0.0, %v267
    %v269 = vpop.f32.mrf.mxu0
    %270 = vdwg.mxu0
    %v271 = vmax.f32 %v268, 0.0
    %v280 = vlaneseq
    %v281 = vshrl.u32 %v280, 7
    %v282 = vsub.s32 %v151, %v281
    %v283 = vrot.slane %v100, %v282
    %v284 = vlaneseq
    %v285 = vshrl.u32 %v284, 7
    %v286 = vsub.s32 %v156, %v285
    %v287 = vrot.slane %v103, %v286
    %v288 = vsel %vm161, %v287, %v283
    %v289 = vlaneseq
    %v290 = vshrl.u32 %v289, 7
    %v291 = vsub.s32 %v163, %v290
    %v292 = vrot.slane %v106, %v291
    %v293 = vsel %vm168, %v292, %v288
    %v294 = vlaneseq
    %v295 = vshrl.u32 %v294, 7
    %v296 = vsub.s32 %v170, %v295
    %v297 = vrot.slane %v109, %v296
    %v298 = vsel %vm175, %v297, %v293
    %v299 = vlaneseq
    %v300 = vshrl.u32 %v299, 7
    %v301 = vsub.s32 %v151, %v300
    %v302 = vrot.slane %v112, %v301
    %v303 = vlaneseq
    %v304 = vshrl.u32 %v303, 7
    %v305 = vsub.s32 %v156, %v304
    %v306 = vrot.slane %v115, %v305
    %v307 = vsel %vm161, %v306, %v302
    %v308 = vlaneseq
    %v309 = vshrl.u32 %v308, 7
    %v310 = vsub.s32 %v163, %v309
    %v311 = vrot.slane %v118, %v310
    %v312 = vsel %vm168, %v311, %v307
    %v313 = vlaneseq
    %v314 = vshrl.u32 %v313, 7
    %v315 = vsub.s32 %v170, %v314
    %v316 = vrot.slane %v121, %v315
    %v317 = vsel %vm175, %v316, %v312
    %v318 = vsel %vm196, %v317, %v298
    %v319 = vsel %vm198, %v318, 0
    %321 = vmatprep.subr.mxu0 0.0
    %322 = vmatpush1.msra.mxu0 0.0
    %323 = vmatprep.subr.mxu0 0.0
    %324 = vmatpush1.msra.mxu0 0.0
    %325 = vmatprep.subr.mxu0 0.0
    %326 = vmatpush1.msra.mxu0 0.0
    %327 = vmatprep.subr.mxu0 0.0
    %328 = vmatpush1.msra.mxu0 0.0
    %329 = vmatprep.subr.mxu0 0.0
    %330 = vmatpush1.msra.mxu0 0.0
    %331 = vmatprep.subr.mxu0 0.0
    %332 = vmatpush1.msra.mxu0 0.0
    %333 = vmatprep.subr.mxu0 0.0
    %334 = vmatpush1.msra.mxu0 0.0
    %335 = vmatprep.subr.mxu0 0.0
    %336 = vmatpush1.msra.mxu0 0.0
    %337 = vmatprep.subr.mxu0 0.0
    %338 = vmatpush1.msra.mxu0 0.0
    %339 = vmatprep.subr.mxu0 0.0
    %340 = vmatpush1.msra.mxu0 0.0
    %341 = vmatprep.subr.mxu0 0.0
    %342 = vmatpush1.msra.mxu0 0.0
    %343 = vmatprep.subr.mxu0 0.0
    %344 = vmatpush1.msra.mxu0 0.0
    %345 = vmatprep.subr.mxu0 0.0
    %346 = vmatpush1.msra.mxu0 %v125
    %347 = vmatprep.subr.mxu0 0.0
    %348 = vmatpush1.msra.mxu0 %v124
    %349 = vmatprep.subr.mxu0 0.0
    %350 = vmatpush1.msra.mxu0 %v123
    %351 = vmatprep.subr.mxu0 0.0
    %352 = vmatpush1.msra.mxu0 %v122
    %353 = vmatprep.subr.mxu0 0.0
    %354 = vmatpush2.msra.mxu0 0.0
    %355 = vmatprep.subr.mxu0 0.0
    %356 = vmatpush2.msra.mxu0 0.0
    %357 = vmatprep.subr.mxu0 0.0
    %358 = vmatpush2.msra.mxu0 0.0
    %359 = vmatprep.subr.mxu0 0.0
    %360 = vmatpush2.msra.mxu0 0.0
    %361 = vmatprep.subr.mxu0 0.0
    %362 = vmatpush2.msra.mxu0 0.0
    %363 = vmatprep.subr.mxu0 0.0
    %364 = vmatpush2.msra.mxu0 0.0
    %365 = vmatprep.subr.mxu0 0.0
    %366 = vmatpush2.msra.mxu0 0.0
    %367 = vmatprep.subr.mxu0 0.0
    %368 = vmatpush2.msra.mxu0 0.0
    %369 = vmatprep.subr.mxu0 0.0
    %370 = vmatpush2.msra.mxu0 0.0
    %371 = vmatprep.subr.mxu0 0.0
    %372 = vmatpush2.msra.mxu0 0.0
    %373 = vmatprep.subr.mxu0 0.0
    %374 = vmatpush2.msra.mxu0 0.0
    %375 = vmatprep.subr.mxu0 0.0
    %376 = vmatpush2.msra.mxu0 0.0
    %377 = vmatprep.subr.mxu0 0.0
    %378 = vmatpush2.msra.mxu0 0.0
    %379 = vmatprep.subr.mxu0 0.0
    %380 = vmatpush2.msra.mxu0 0.0
    %381 = vmatprep.subr.mxu0 0.0
    %382 = vmatpush2.msra.mxu0 0.0
    %383 = vmatprep.subr.mxu0 0.0
    %384 = vmatpush2.msra.mxu0 0.0
    %385 = vmatprep.mubr.f32.mxu0 0.0
    %386 = vmatmul.mubr.f32.gmra.mxu0 %v319
    %v387 = vpop.f32.mrf.mxu0
    %v388 = vadd.f32 0.0, %v387
    %v389 = vpop.f32.mrf.mxu0
    %390 = vdwg.mxu0
    %v391 = vmax.f32 %v388, 0.0
    %392 = vmatprep.subr.mxu0 0.0
    %393 = vmatpush1.msra.mxu0 %v141
    %394 = vmatprep.subr.mxu0 0.0
    %395 = vmatpush1.msra.mxu0 %v140
    %396 = vmatprep.subr.mxu0 0.0
    %397 = vmatpush1.msra.mxu0 %v139
    %398 = vmatprep.subr.mxu0 0.0
    %399 = vmatpush1.msra.mxu0 %v138
    %400 = vmatprep.subr.mxu0 0.0
    %401 = vmatpush1.msra.mxu0 %v137
    %402 = vmatprep.subr.mxu0 0.0
    %403 = vmatpush1.msra.mxu0 %v136
    %404 = vmatprep.subr.mxu0 0.0
    %405 = vmatpush1.msra.mxu0 %v135
    %406 = vmatprep.subr.mxu0 0.0
    %407 = vmatpush1.msra.mxu0 %v134
    %408 = vmatprep.subr.mxu0 0.0
    %409 = vmatpush1.msra.mxu0 %v133
    %410 = vmatprep.subr.mxu0 0.0
    %411 = vmatpush1.msra.mxu0 %v132
    %412 = vmatprep.subr.mxu0 0.0
    %413 = vmatpush1.msra.mxu0 %v131
    %414 = vmatprep.subr.mxu0 0.0
    %415 = vmatpush1.msra.mxu0 %v130
    %416 = vmatprep.subr.mxu0 0.0
    %417 = vmatpush1.msra.mxu0 %v129
    %418 = vmatprep.subr.mxu0 0.0
    %419 = vmatpush1.msra.mxu0 %v128
    %420 = vmatprep.subr.mxu0 0.0
    %421 = vmatpush1.msra.mxu0 %v127
    %422 = vmatprep.subr.mxu0 0.0
    %423 = vmatpush1.msra.mxu0 %v126
    %424 = vmatprep.subr.mxu0 0.0
    %425 = vmatpush2.msra.mxu0 0.0
    %426 = vmatprep.subr.mxu0 0.0
    %427 = vmatpush2.msra.mxu0 0.0
    %428 = vmatprep.subr.mxu0 0.0
    %429 = vmatpush2.msra.mxu0 0.0
    %430 = vmatprep.subr.mxu0 0.0
    %431 = vmatpush2.msra.mxu0 0.0
    %432 = vmatprep.subr.mxu0 0.0
    %433 = vmatpush2.msra.mxu0 0.0
    %434 = vmatprep.subr.mxu0 0.0
    %435 = vmatpush2.msra.mxu0 0.0
    %436 = vmatprep.subr.mxu0 0.0
    %437 = vmatpush2.msra.mxu0 0.0
    %438 = vmatprep.subr.mxu0 0.0
    %439 = vmatpush2.msra.mxu0 0.0
    %440 = vmatprep.subr.mxu0 0.0
    %441 = vmatpush2.msra.mxu0 0.0
    %442 = vmatprep.subr.mxu0 0.0
    %443 = vmatpush2.msra.mxu0 0.0
    %444 = vmatprep.subr.mxu0 0.0
    %445 = vmatpush2.msra.mxu0 0.0
    %446 = vmatprep.subr.mxu0 0.0
    %447 = vmatpush2.msra.mxu0 0.0
    %448 = vmatprep.subr.mxu0 0.0
    %449 = vmatpush2.msra.mxu0 0.0
    %450 = vmatprep.subr.mxu0 0.0
    %451 = vmatpush2.msra.mxu0 0.0
    %452 = vmatprep.subr.mxu0 0.0
    %453 = vmatpush2.msra.mxu0 0.0
    %454 = vmatprep.subr.mxu0 0.0
    %455 = vmatpush2.msra.mxu0 0.0
    %456 = vmatprep.mubr.f32.mxu0 0.0
    %457 = vmatmul.mubr.f32.gmra.mxu0 %v391
    %v458 = vpop.f32.mrf.mxu0
    %v459 = vadd.f32 0.0, %v458
    %v460 = vpop.f32.mrf.mxu0
    %461 = vdwg.mxu0
    %462 = vmatprep.subr.mxu0 0.0
    %463 = vmatpush1.msra.mxu0 %v141
    %464 = vmatprep.subr.mxu0 0.0
    %465 = vmatpush1.msra.mxu0 %v140
    %466 = vmatprep.subr.mxu0 0.0
    %467 = vmatpush1.msra.mxu0 %v139
    %468 = vmatprep.subr.mxu0 0.0
    %469 = vmatpush1.msra.mxu0 %v138
    %470 = vmatprep.subr.mxu0 0.0
    %471 = vmatpush1.msra.mxu0 %v137
    %472 = vmatprep.subr.mxu0 0.0
    %473 = vmatpush1.msra.mxu0 %v136
    %474 = vmatprep.subr.mxu0 0.0
    %475 = vmatpush1.msra.mxu0 %v135
    %476 = vmatprep.subr.mxu0 0.0
    %477 = vmatpush1.msra.mxu0 %v134
    %478 = vmatprep.subr.mxu0 0.0
    %479 = vmatpush1.msra.mxu0 %v133
    %480 = vmatprep.subr.mxu0 0.0
    %481 = vmatpush1.msra.mxu0 %v132
    %482 = vmatprep.subr.mxu0 0.0
    %483 = vmatpush1.msra.mxu0 %v131
    %484 = vmatprep.subr.mxu0 0.0
    %485 = vmatpush1.msra.mxu0 %v130
    %486 = vmatprep.subr.mxu0 0.0
    %487 = vmatpush1.msra.mxu0 %v129
    %488 = vmatprep.subr.mxu0 0.0
    %489 = vmatpush1.msra.mxu0 %v128
    %490 = vmatprep.subr.mxu0 0.0
    %491 = vmatpush1.msra.mxu0 %v127
    %492 = vmatprep.subr.mxu0 0.0
    %493 = vmatpush1.msra.mxu0 %v126
    %494 = vmatprep.subr.mxu0 0.0
    %495 = vmatpush2.msra.mxu0 0.0
    %496 = vmatprep.subr.mxu0 0.0
    %497 = vmatpush2.msra.mxu0 0.0
    %498 = vmatprep.subr.mxu0 0.0
    %499 = vmatpush2.msra.mxu0 0.0
    %500 = vmatprep.subr.mxu0 0.0
    %501 = vmatpush2.msra.mxu0 0.0
    %502 = vmatprep.subr.mxu0 0.0
    %503 = vmatpush2.msra.mxu0 0.0
    %504 = vmatprep.subr.mxu0 0.0
    %505 = vmatpush2.msra.mxu0 0.0
    %506 = vmatprep.subr.mxu0 0.0
    %507 = vmatpush2.msra.mxu0 0.0
    %508 = vmatprep.subr.mxu0 0.0
    %509 = vmatpush2.msra.mxu0 0.0
    %510 = vmatprep.subr.mxu0 0.0
    %511 = vmatpush2.msra.mxu0 0.0
    %512 = vmatprep.subr.mxu0 0.0
    %513 = vmatpush2.msra.mxu0 0.0
    %514 = vmatprep.subr.mxu0 0.0
    %515 = vmatpush2.msra.mxu0 0.0
    %516 = vmatprep.subr.mxu0 0.0
    %517 = vmatpush2.msra.mxu0 0.0
    %518 = vmatprep.subr.mxu0 0.0
    %519 = vmatpush2.msra.mxu0 0.0
    %520 = vmatprep.subr.mxu0 0.0
    %521 = vmatpush2.msra.mxu0 0.0
    %522 = vmatprep.subr.mxu0 0.0
    %523 = vmatpush2.msra.mxu0 0.0
    %524 = vmatprep.subr.mxu0 0.0
    %525 = vmatpush2.msra.mxu0 0.0
    %526 = vmatprep.mubr.f32.mxu0 0.0
    %527 = vmatmul.mubr.f32.gmra.mxu0 %v271
    %v528 = vpop.f32.mrf.mxu0
    %v529 = vadd.f32 %v459, %v528
    %v530 = vpop.f32.mrf.mxu0
    %531 = vdwg.mxu0
    %v532 = vxor.u32 %v529, 2147483648
    %v533 = vmul.f32 %v532, 1.442695
    %v534 = vpow.pop %v533
    %v535 = vadd.f32 %v534, 1.0
    %v536 = vrcp.pop %v535
    %v537 = vmul.f32 1.0, %v536
    %v538 = vlaneseq
    %v539 = vshrl.u32 %v538, 7
    %v540 = vsub.s32 0, %v539
    %v541 = vrot.slane %v537, %v540
    %543 = vbcast.lane.b32.xlu0 %v541, 256
    %v544 = vpop.permute.xlu0 %543
    %s546 = sor.u32 256, 8
    %547 = vbcast.lane.b32.xlu0 %v541, %s546
    %v548 = vpop.permute.xlu0 %547
    %s550 = sor.u32 256, 16
    %551 = vbcast.lane.b32.xlu0 %v541, %s550
    %v552 = vpop.permute.xlu0 %551
    %s554 = sor.u32 256, 24
    %555 = vbcast.lane.b32.xlu0 %v541, %s554
    %v556 = vpop.permute.xlu0 %555
    %v557 = vlaneseq
    %v558 = vshrl.u32 %v557, 7
    %v559 = vsub.s32 1, %v558
    %v560 = vrot.slane %v537, %v559
    %562 = vbcast.lane.b32.xlu0 %v560, 256
    %v563 = vpop.permute.xlu0 %562
    %s565 = sor.u32 256, 8
    %566 = vbcast.lane.b32.xlu0 %v560, %s565
    %v567 = vpop.permute.xlu0 %566
    %s569 = sor.u32 256, 16
    %570 = vbcast.lane.b32.xlu0 %v560, %s569
    %v571 = vpop.permute.xlu0 %570
    %s573 = sor.u32 256, 24
    %574 = vbcast.lane.b32.xlu0 %v560, %s573
    %v575 = vpop.permute.xlu0 %574
    %v576 = vmul.f32 %v49, %v544
    %v577 = vmul.f32 %v50, %v544
    %v578 = vmul.f32 %v51, %v548
    %v579 = vmul.f32 %v52, %v548
    %v580 = vmul.f32 %v53, %v552
    %v581 = vmul.f32 %v54, %v552
    %v582 = vmul.f32 %v55, %v556
    %v583 = vmul.f32 %v56, %v556
    %v584 = vmul.f32 %v57, %v563
    %v585 = vmul.f32 %v58, %v563
    %v586 = vmul.f32 %v59, %v567
    %v587 = vmul.f32 %v60, %v567
    %v588 = vmul.f32 %v61, %v571
    %v589 = vmul.f32 %v62, %v571
    %v590 = vmul.f32 %v63, %v575
    %v591 = vmul.f32 %v64, %v575
    %v592 = vadd.f32 %v576, %v578
    %v593 = vadd.f32 %v592, %v580
    %v594 = vadd.f32 %v593, %v582
    %v595 = vrot.slane %v594, 4
    %v596 = vadd.f32 %v594, %v595
    %v597 = vrot.slane %v596, 2
    %v598 = vadd.f32 %v596, %v597
    %v599 = vrot.slane %v598, 1
    %v600 = vadd.f32 %v598, %v599
    %v601 = vadd.f32 %v577, %v579
    %v602 = vadd.f32 %v601, %v581
    %v603 = vadd.f32 %v602, %v583
    %v604 = vrot.slane %v603, 4
    %v605 = vadd.f32 %v603, %v604
    %v606 = vrot.slane %v605, 2
    %v607 = vadd.f32 %v605, %v606
    %v608 = vrot.slane %v607, 1
    %v609 = vadd.f32 %v607, %v608
    %v610 = vadd.f32 %v584, %v586
    %v611 = vadd.f32 %v610, %v588
    %v612 = vadd.f32 %v611, %v590
    %v613 = vrot.slane %v612, 4
    %v614 = vadd.f32 %v612, %v613
    %v615 = vrot.slane %v614, 2
    %v616 = vadd.f32 %v614, %v615
    %v617 = vrot.slane %v616, 1
    %v618 = vadd.f32 %v616, %v617
    %v619 = vadd.f32 %v585, %v587
    %v620 = vadd.f32 %v619, %v589
    %v621 = vadd.f32 %v620, %v591
    %v622 = vrot.slane %v621, 4
    %v623 = vadd.f32 %v621, %v622
    %v624 = vrot.slane %v623, 2
    %v625 = vadd.f32 %v623, %v624
    %v626 = vrot.slane %v625, 1
    %v627 = vadd.f32 %v625, %v626
    %v628 = vrcp.pop 32.0
    %v629 = vmul.f32 %v600, %v628
    %v630 = vmul.f32 %v609, %v628
    %v631 = vmul.f32 %v618, %v628
    %v632 = vmul.f32 %v627, %v628
    %v633 = vmax.f32 %v576, %v578
    %v634 = vmax.f32 %v633, %v580
    %v635 = vmax.f32 %v634, %v582
    %v636 = vrot.slane %v635, 4
    %v637 = vmax.f32 %v635, %v636
    %v638 = vrot.slane %v637, 2
    %v639 = vmax.f32 %v637, %v638
    %v640 = vrot.slane %v639, 1
    %v641 = vmax.f32 %v639, %v640
    %v642 = vmax.f32 %v577, %v579
    %v643 = vmax.f32 %v642, %v581
    %v644 = vmax.f32 %v643, %v583
    %v645 = vrot.slane %v644, 4
    %v646 = vmax.f32 %v644, %v645
    %v647 = vrot.slane %v646, 2
    %v648 = vmax.f32 %v646, %v647
    %v649 = vrot.slane %v648, 1
    %v650 = vmax.f32 %v648, %v649
    %v651 = vmax.f32 %v584, %v586
    %v652 = vmax.f32 %v651, %v588
    %v653 = vmax.f32 %v652, %v590
    %v654 = vrot.slane %v653, 4
    %v655 = vmax.f32 %v653, %v654
    %v656 = vrot.slane %v655, 2
    %v657 = vmax.f32 %v655, %v656
    %v658 = vrot.slane %v657, 1
    %v659 = vmax.f32 %v657, %v658
    %v660 = vmax.f32 %v585, %v587
    %v661 = vmax.f32 %v660, %v589
    %v662 = vmax.f32 %v661, %v591
    %v663 = vrot.slane %v662, 4
    %v664 = vmax.f32 %v662, %v663
    %v665 = vrot.slane %v664, 2
    %v666 = vmax.f32 %v664, %v665
    %v667 = vrot.slane %v666, 1
    %v668 = vmax.f32 %v666, %v667
    %v669 = vld [vmem:[#allocation2] sm:$0xff]
    %v670 = vld [vmem:[#allocation2 + $0x8] sm:$0xff]
    %v671 = vld [vmem:[#allocation2 + $0x10] sm:$0xff]
    %v672 = vld [vmem:[#allocation2 + $0x18] sm:$0xff]
    %v673 = vld [vmem:[#allocation2 + $0x20] sm:$0xff]
    %v674 = vld [vmem:[#allocation2 + $0x28] sm:$0xff]
    %v675 = vld [vmem:[#allocation2 + $0x30] sm:$0xff]
    %v676 = vld [vmem:[#allocation2 + $0x38] sm:$0xff]
    %v677 = vld [vmem:[#allocation2 + $0x40] sm:$0xff]
    %v678 = vld [vmem:[#allocation2 + $0x48] sm:$0xff]
    %v679 = vld [vmem:[#allocation2 + $0x50] sm:$0xff]
    %v680 = vld [vmem:[#allocation2 + $0x58] sm:$0xff]
    %v681 = vld [vmem:[#allocation2 + $0x60] sm:$0xff]
    %v682 = vld [vmem:[#allocation2 + $0x68] sm:$0xff]
    %v683 = vld [vmem:[#allocation2 + $0x70] sm:$0xff]
    %v684 = vld [vmem:[#allocation2 + $0x78] sm:$0xff]
    %v685 = vld [vmem:[#allocation2 + $0x80] sm:$0xff]
    %v686 = vld [vmem:[#allocation2 + $0x88] sm:$0xff]
    %v687 = vld [vmem:[#allocation2 + $0x90] sm:$0xff]
    %v688 = vld [vmem:[#allocation2 + $0x98] sm:$0xff]
    %v689 = vld [vmem:[#allocation2 + $0xa0] sm:$0xff]
    %v690 = vld [vmem:[#allocation2 + $0xa8] sm:$0xff]
    %v691 = vld [vmem:[#allocation2 + $0xb0] sm:$0xff]
    %v692 = vld [vmem:[#allocation2 + $0xb8] sm:$0xff]
    %v693 = vld [vmem:[#allocation2 + $0xc0] sm:$0xff]
    %v694 = vld [vmem:[#allocation2 + $0xc8] sm:$0xff]
    %v695 = vld [vmem:[#allocation2 + $0xd0] sm:$0xff]
    %v696 = vld [vmem:[#allocation2 + $0xd8] sm:$0xff]
    %v697 = vld [vmem:[#allocation2 + $0xe0] sm:$0xff]
    %v698 = vld [vmem:[#allocation2 + $0xe8] sm:$0xff]
    %v699 = vld [vmem:[#allocation2 + $0xf0] sm:$0xff]
    %v700 = vld [vmem:[#allocation2 + $0xf8] sm:$0xff]
    %v701 = vld [vmem:[#allocation2 + $0x100] sm:$0xff]
    %v702 = vld [vmem:[#allocation2 + $0x108] sm:$0xff]
    %v703 = vld [vmem:[#allocation2 + $0x110] sm:$0xff]
    %v704 = vld [vmem:[#allocation2 + $0x118] sm:$0xff]
    %v705 = vld [vmem:[#allocation2 + $0x120] sm:$0xff]
    %v706 = vld [vmem:[#allocation2 + $0x128] sm:$0xff]
    %v707 = vld [vmem:[#allocation2 + $0x130] sm:$0xff]
    %v708 = vld [vmem:[#allocation2 + $0x138] sm:$0xff]
    %v709 = vld [vmem:[#allocation2 + $0x140] sm:$0xff]
    %v710 = vld [vmem:[#allocation2 + $0x148] sm:$0xff]
    %v711 = vld [vmem:[#allocation2 + $0x150] sm:$0xff]
    %v712 = vld [vmem:[#allocation2 + $0x158] sm:$0xff]
    %v713 = vld [vmem:[#allocation2 + $0x160] sm:$0xff]
    %v714 = vld [vmem:[#allocation2 + $0x168] sm:$0xff]
    %v715 = vld [vmem:[#allocation2 + $0x170] sm:$0xff]
    %v716 = vld [vmem:[#allocation2 + $0x178] sm:$0xff]
    %v717 = vld [vmem:[#allocation2 + $0x180] sm:$0xff]
    %v718 = vld [vmem:[#allocation2 + $0x188] sm:$0xff]
    %v719 = vld [vmem:[#allocation2 + $0x190] sm:$0xff]
    %v720 = vld [vmem:[#allocation2 + $0x198] sm:$0xff]
    %v721 = vld [vmem:[#allocation2 + $0x1a0] sm:$0xff]
    %v722 = vld [vmem:[#allocation2 + $0x1a8] sm:$0xff]
    %v723 = vld [vmem:[#allocation2 + $0x1b0] sm:$0xff]
    %v724 = vld [vmem:[#allocation2 + $0x1b8] sm:$0xff]
    %v725 = vld [vmem:[#allocation2 + $0x1c0] sm:$0xff]
    %v726 = vld [vmem:[#allocation2 + $0x1c8] sm:$0xff]
    %v727 = vld [vmem:[#allocation2 + $0x1d0] sm:$0xff]
    %v728 = vld [vmem:[#allocation2 + $0x1d8] sm:$0xff]
    %v729 = vld [vmem:[#allocation2 + $0x1e0] sm:$0xff]
    %v730 = vld [vmem:[#allocation2 + $0x1e8] sm:$0xff]
    %v731 = vld [vmem:[#allocation2 + $0x1f0] sm:$0xff]
    %v732 = vld [vmem:[#allocation2 + $0x1f8] sm:$0xff]
    %v733 = vld [vmem:[#allocation5] sm:$0xff]
    %v734 = vld [vmem:[#allocation5 + $0x8] sm:$0xff]
    %v735 = vld [vmem:[#allocation5 + $0x10] sm:$0xff]
    %v736 = vld [vmem:[#allocation5 + $0x18] sm:$0xff]
    %v737 = vld [vmem:[#allocation5 + $0x20] sm:$0xff]
    %v738 = vld [vmem:[#allocation5 + $0x28] sm:$0xff]
    %v739 = vld [vmem:[#allocation5 + $0x30] sm:$0xff]
    %v740 = vld [vmem:[#allocation5 + $0x38] sm:$0xff]
    %v741 = vld [vmem:[#allocation5 + $0x40] sm:$0xff]
    %v742 = vld [vmem:[#allocation5 + $0x48] sm:$0xff]
    %v743 = vld [vmem:[#allocation5 + $0x50] sm:$0xff]
    %v744 = vld [vmem:[#allocation5 + $0x58] sm:$0xff]
    %v745 = vld [vmem:[#allocation5 + $0x60] sm:$0xff]
    %v746 = vld [vmem:[#allocation5 + $0x68] sm:$0xff]
    %v747 = vld [vmem:[#allocation5 + $0x70] sm:$0xff]
    %v748 = vld [vmem:[#allocation5 + $0x78] sm:$0xff]
    %v749 = vld [vmem:[#allocation5 + $0x80] sm:$0xff]
    %v750 = vld [vmem:[#allocation5 + $0x88] sm:$0xff]
    %v751 = vld [vmem:[#allocation5 + $0x90] sm:$0xff]
    %v752 = vld [vmem:[#allocation5 + $0x98] sm:$0xff]
    %v753 = vld [vmem:[#allocation5 + $0xa0] sm:$0xff]
    %v754 = vld [vmem:[#allocation5 + $0xa8] sm:$0xff]
    %v755 = vld [vmem:[#allocation5 + $0xb0] sm:$0xff]
    %v756 = vld [vmem:[#allocation5 + $0xb8] sm:$0xff]
    %v757 = vld [vmem:[#allocation5 + $0xc0] sm:$0xff]
    %v758 = vld [vmem:[#allocation5 + $0xc8] sm:$0xff]
    %v759 = vld [vmem:[#allocation5 + $0xd0] sm:$0xff]
    %v760 = vld [vmem:[#allocation5 + $0xd8] sm:$0xff]
    %v761 = vld [vmem:[#allocation5 + $0xe0] sm:$0xff]
    %v762 = vld [vmem:[#allocation5 + $0xe8] sm:$0xff]
    %v763 = vld [vmem:[#allocation5 + $0xf0] sm:$0xff]
    %v764 = vld [vmem:[#allocation5 + $0xf8] sm:$0xff]
    %v765 = vld [vmem:[#allocation5 + $0x100] sm:$0xff]
    %v766 = vld [vmem:[#allocation5 + $0x108] sm:$0xff]
    %v767 = vld [vmem:[#allocation5 + $0x110] sm:$0xff]
    %v768 = vld [vmem:[#allocation5 + $0x118] sm:$0xff]
    %v769 = vld [vmem:[#allocation5 + $0x120] sm:$0xff]
    %v770 = vld [vmem:[#allocation5 + $0x128] sm:$0xff]
    %v771 = vld [vmem:[#allocation5 + $0x130] sm:$0xff]
    %v772 = vld [vmem:[#allocation5 + $0x138] sm:$0xff]
    %v773 = vld [vmem:[#allocation5 + $0x140] sm:$0xff]
    %v774 = vld [vmem:[#allocation5 + $0x148] sm:$0xff]
    %v775 = vld [vmem:[#allocation5 + $0x150] sm:$0xff]
    %v776 = vld [vmem:[#allocation5 + $0x158] sm:$0xff]
    %v777 = vld [vmem:[#allocation5 + $0x160] sm:$0xff]
    %v778 = vld [vmem:[#allocation5 + $0x168] sm:$0xff]
    %v779 = vld [vmem:[#allocation5 + $0x170] sm:$0xff]
    %v780 = vld [vmem:[#allocation5 + $0x178] sm:$0xff]
    %v781 = vld [vmem:[#allocation5 + $0x180] sm:$0xff]
    %v782 = vld [vmem:[#allocation5 + $0x188] sm:$0xff]
    %v783 = vld [vmem:[#allocation5 + $0x190] sm:$0xff]
    %v784 = vld [vmem:[#allocation5 + $0x198] sm:$0xff]
    %v785 = vld [vmem:[#allocation5 + $0x1a0] sm:$0xff]
    %v786 = vld [vmem:[#allocation5 + $0x1a8] sm:$0xff]
    %v787 = vld [vmem:[#allocation5 + $0x1b0] sm:$0xff]
    %v788 = vld [vmem:[#allocation5 + $0x1b8] sm:$0xff]
    %v789 = vld [vmem:[#allocation5 + $0x1c0] sm:$0xff]
    %v790 = vld [vmem:[#allocation5 + $0x1c8] sm:$0xff]
    %v791 = vld [vmem:[#allocation5 + $0x1d0] sm:$0xff]
    %v792 = vld [vmem:[#allocation5 + $0x1d8] sm:$0xff]
    %v793 = vld [vmem:[#allocation5 + $0x1e0] sm:$0xff]
    %v794 = vld [vmem:[#allocation5 + $0x1e8] sm:$0xff]
    %v795 = vld [vmem:[#allocation5 + $0x1f0] sm:$0xff]
    %v796 = vld [vmem:[#allocation5 + $0x1f8] sm:$0xff]
    %v801 = vsel %vm196, %v659, %v641
    %v802 = vsel %vm196, %v668, %v650
    %805 = vmatprep.subr.mxu0 %v764
    %806 = vmatpush1.msra.mxu0 %v763
    %807 = vmatprep.subr.mxu0 %v762
    %808 = vmatpush1.msra.mxu0 %v761
    %809 = vmatprep.subr.mxu0 %v760
    %810 = vmatpush1.msra.mxu0 %v759
    %811 = vmatprep.subr.mxu0 %v758
    %812 = vmatpush1.msra.mxu0 %v757
    %813 = vmatprep.subr.mxu0 %v756
    %814 = vmatpush1.msra.mxu0 %v755
    %815 = vmatprep.subr.mxu0 %v754
    %816 = vmatpush1.msra.mxu0 %v753
    %817 = vmatprep.subr.mxu0 %v752
    %818 = vmatpush1.msra.mxu0 %v751
    %819 = vmatprep.subr.mxu0 %v750
    %820 = vmatpush1.msra.mxu0 %v749
    %821 = vmatprep.subr.mxu0 %v748
    %822 = vmatpush1.msra.mxu0 %v747
    %823 = vmatprep.subr.mxu0 %v746
    %824 = vmatpush1.msra.mxu0 %v745
    %825 = vmatprep.subr.mxu0 %v744
    %826 = vmatpush1.msra.mxu0 %v743
    %827 = vmatprep.subr.mxu0 %v742
    %828 = vmatpush1.msra.mxu0 %v741
    %829 = vmatprep.subr.mxu0 %v740
    %830 = vmatpush1.msra.mxu0 %v739
    %831 = vmatprep.subr.mxu0 %v738
    %832 = vmatpush1.msra.mxu0 %v737
    %833 = vmatprep.subr.mxu0 %v736
    %834 = vmatpush1.msra.mxu0 %v735
    %835 = vmatprep.subr.mxu0 %v734
    %836 = vmatpush1.msra.mxu0 %v733
    %837 = vmatprep.subr.mxu0 %v796
    %838 = vmatpush2.msra.mxu0 %v795
    %839 = vmatprep.subr.mxu0 %v794
    %840 = vmatpush2.msra.mxu0 %v793
    %841 = vmatprep.subr.mxu0 %v792
    %842 = vmatpush2.msra.mxu0 %v791
    %843 = vmatprep.subr.mxu0 %v790
    %844 = vmatpush2.msra.mxu0 %v789
    %845 = vmatprep.subr.mxu0 %v788
    %846 = vmatpush2.msra.mxu0 %v787
    %847 = vmatprep.subr.mxu0 %v786
    %848 = vmatpush2.msra.mxu0 %v785
    %849 = vmatprep.subr.mxu0 %v784
    %850 = vmatpush2.msra.mxu0 %v783
    %851 = vmatprep.subr.mxu0 %v782
    %852 = vmatpush2.msra.mxu0 %v781
    %853 = vmatprep.subr.mxu0 %v780
    %854 = vmatpush2.msra.mxu0 %v779
    %855 = vmatprep.subr.mxu0 %v778
    %856 = vmatpush2.msra.mxu0 %v777
    %857 = vmatprep.subr.mxu0 %v776
    %858 = vmatpush2.msra.mxu0 %v775
    %859 = vmatprep.subr.mxu0 %v774
    %860 = vmatpush2.msra.mxu0 %v773
    %861 = vmatprep.subr.mxu0 %v772
    %862 = vmatpush2.msra.mxu0 %v771
    %863 = vmatprep.subr.mxu0 %v770
    %864 = vmatpush2.msra.mxu0 %v769
    %865 = vmatprep.subr.mxu0 %v768
    %866 = vmatpush2.msra.mxu0 %v767
    %867 = vmatprep.subr.mxu0 %v766
    %868 = vmatpush2.msra.mxu0 %v765
    %869 = vmatprep.mubr.f32.mxu0 %v802
    %870 = vmatmul.mubr.f32.gmra.mxu0 %v801
    %v871 = vpop.f32.mrf.mxu0
    %v872 = vadd.f32 0.0, %v871
    %v873 = vpop.f32.mrf.mxu0
    %v874 = vadd.f32 0.0, %v873
    %875 = vdwg.mxu0
    %v880 = vsel %vm196, %v631, %v629
    %v881 = vsel %vm196, %v632, %v630
    %884 = vmatprep.subr.mxu0 %v700
    %885 = vmatpush1.msra.mxu0 %v699
    %886 = vmatprep.subr.mxu0 %v698
    %887 = vmatpush1.msra.mxu0 %v697
    %888 = vmatprep.subr.mxu0 %v696
    %889 = vmatpush1.msra.mxu0 %v695
    %890 = vmatprep.subr.mxu0 %v694
    %891 = vmatpush1.msra.mxu0 %v693
    %892 = vmatprep.subr.mxu0 %v692
    %893 = vmatpush1.msra.mxu0 %v691
    %894 = vmatprep.subr.mxu0 %v690
    %895 = vmatpush1.msra.mxu0 %v689
    %896 = vmatprep.subr.mxu0 %v688
    %897 = vmatpush1.msra.mxu0 %v687
    %898 = vmatprep.subr.mxu0 %v686
    %899 = vmatpush1.msra.mxu0 %v685
    %900 = vmatprep.subr.mxu0 %v684
    %901 = vmatpush1.msra.mxu0 %v683
    %902 = vmatprep.subr.mxu0 %v682
    %903 = vmatpush1.msra.mxu0 %v681
    %904 = vmatprep.subr.mxu0 %v680
    %905 = vmatpush1.msra.mxu0 %v679
    %906 = vmatprep.subr.mxu0 %v678
    %907 = vmatpush1.msra.mxu0 %v677
    %908 = vmatprep.subr.mxu0 %v676
    %909 = vmatpush1.msra.mxu0 %v675
    %910 = vmatprep.subr.mxu0 %v674
    %911 = vmatpush1.msra.mxu0 %v673
    %912 = vmatprep.subr.mxu0 %v672
    %913 = vmatpush1.msra.mxu0 %v671
    %914 = vmatprep.subr.mxu0 %v670
    %915 = vmatpush1.msra.mxu0 %v669
    %916 = vmatprep.subr.mxu0 %v732
    %917 = vmatpush2.msra.mxu0 %v731
    %918 = vmatprep.subr.mxu0 %v730
    %919 = vmatpush2.msra.mxu0 %v729
    %920 = vmatprep.subr.mxu0 %v728
    %921 = vmatpush2.msra.mxu0 %v727
    %922 = vmatprep.subr.mxu0 %v726
    %923 = vmatpush2.msra.mxu0 %v725
    %924 = vmatprep.subr.mxu0 %v724
    %925 = vmatpush2.msra.mxu0 %v723
    %926 = vmatprep.subr.mxu0 %v722
    %927 = vmatpush2.msra.mxu0 %v721
    %928 = vmatprep.subr.mxu0 %v720
    %929 = vmatpush2.msra.mxu0 %v719
    %930 = vmatprep.subr.mxu0 %v718
    %931 = vmatpush2.msra.mxu0 %v717
    %932 = vmatprep.subr.mxu0 %v716
    %933 = vmatpush2.msra.mxu0 %v715
    %934 = vmatprep.subr.mxu0 %v714
    %935 = vmatpush2.msra.mxu0 %v713
    %936 = vmatprep.subr.mxu0 %v712
    %937 = vmatpush2.msra.mxu0 %v711
    %938 = vmatprep.subr.mxu0 %v710
    %939 = vmatpush2.msra.mxu0 %v709
    %940 = vmatprep.subr.mxu0 %v708
    %941 = vmatpush2.msra.mxu0 %v707
    %942 = vmatprep.subr.mxu0 %v706
    %943 = vmatpush2.msra.mxu0 %v705
    %944 = vmatprep.subr.mxu0 %v704
    %945 = vmatpush2.msra.mxu0 %v703
    %946 = vmatprep.subr.mxu0 %v702
    %947 = vmatpush2.msra.mxu0 %v701
    %948 = vmatprep.mubr.f32.mxu0 %v881
    %949 = vmatmul.mubr.f32.gmra.mxu0 %v880
    %v950 = vpop.f32.mrf.mxu0
    %v951 = vadd.f32 %v872, %v950
    %v952 = vpop.f32.mrf.mxu0
    %v953 = vadd.f32 %v874, %v952
    %954 = vdwg.mxu0
    %v955 = vxor.u32 %v951, 2147483648
    %v956 = vxor.u32 %v953, 2147483648
    %v957 = vmul.f32 %v955, 1.442695
    %v958 = vpow.pop %v957
    %v959 = vmul.f32 %v956, 1.442695
    %v960 = vpow.pop %v959
    %v961 = vadd.f32 %v958, 1.0
    %v962 = vadd.f32 %v960, 1.0
    %v963 = vrcp.pop %v961
    %v964 = vmul.f32 1.0, %v963
    %v965 = vrcp.pop %v962
    %v966 = vmul.f32 1.0, %v965
    %v969 = vcombine.low %v964, %v966
    %v971 = vunpack.c.l.s4 1966171168
    %v972 = vunpack.c.0.s8 %v971
    %v973 = vlaneseq
    %v974 = vshrl.u32 %v973, 7
    %v975 = vsub.s32 %v972, %v974
    %v976 = vrot.slane %v969, %v975
    %v977 = vcombine.high %v976, %v976
    %v979 = vunpack.c.l.s4 1966171168
    %v980 = vunpack.c.0.s8 %v979
    %v981 = vlaneseq
    %v982 = vshrl.u32 %v981, 7
    %v983 = vsub.s32 %v980, %v982
    %v984 = vrot.slane %v976, %v983
    %v986 = vunpack.c.l.s4 1966171168
    %v987 = vunpack.c.0.s8 %v986
    %v988 = vlaneseq
    %v989 = vshrl.u32 %v988, 7
    %v990 = vsub.s32 %v987, %v989
    %v991 = vrot.slane %v977, %v990
    %v992 = vlaneseq
    %v993 = vshrl.u32 %v992, 7
    %v994 = vsub.s32 0, %v993
    %v995 = vrot.slane %v984, %v994
    %v996 = vlaneseq
    %v997 = vshrl.u32 %v996, 7
    %v998 = vsub.s32 1, %v997
    %v999 = vrot.slane %v984, %v998
    %v1000 = vlaneseq
    %v1001 = vshrl.u32 %v1000, 7
    %v1002 = vsub.s32 0, %v1001
    %v1003 = vrot.slane %v991, %v1002
    %v1004 = vlaneseq
    %v1005 = vshrl.u32 %v1004, 7
    %v1006 = vsub.s32 1, %v1005
    %v1007 = vrot.slane %v991, %v1006
    %v1012 = vmul.f32 %v576, %v995
    %v1013 = vmul.f32 %v577, %v999
    %v1014 = vmul.f32 %v578, %v995
    %v1015 = vmul.f32 %v579, %v999
    %v1016 = vmul.f32 %v580, %v995
    %v1017 = vmul.f32 %v581, %v999
    %v1018 = vmul.f32 %v582, %v995
    %v1019 = vmul.f32 %v583, %v999
    %v1020 = vmul.f32 %v584, %v1003
    %v1021 = vmul.f32 %v585, %v1007
    %v1022 = vmul.f32 %v586, %v1003
    %v1023 = vmul.f32 %v587, %v1007
    %v1024 = vmul.f32 %v588, %v1003
    %v1025 = vmul.f32 %v589, %v1007
    %v1026 = vmul.f32 %v590, %v1003
    %v1027 = vmul.f32 %v591, %v1007
    %v1028 = vadd.f32 %v1012, %v49
    %v1029 = vadd.f32 %v1013, %v50
    %v1030 = vadd.f32 %v1014, %v51
    %v1031 = vadd.f32 %v1015, %v52
    %v1032 = vadd.f32 %v1016, %v53
    %v1033 = vadd.f32 %v1017, %v54
    %v1034 = vadd.f32 %v1018, %v55
    %v1035 = vadd.f32 %v1019, %v56
    %v1036 = vadd.f32 %v1020, %v57
    %v1037 = vadd.f32 %v1021, %v58
    %v1038 = vadd.f32 %v1022, %v59
    %v1039 = vadd.f32 %v1023, %v60
    %v1040 = vadd.f32 %v1024, %v61
    %v1041 = vadd.f32 %v1025, %v62
    %v1042 = vadd.f32 %v1026, %v63
    %v1043 = vadd.f32 %v1027, %v64
    %1044 = vst [vmem:[#allocation7] sm:$0xff] %v1028
    %1045 = vst [vmem:[#allocation7 + $0x8] sm:$0xff] %v1029
    %1046 = vst [vmem:[#allocation7 + $0x10] sm:$0xff] %v1030
    %1047 = vst [vmem:[#allocation7 + $0x18] sm:$0xff] %v1031
    %1048 = vst [vmem:[#allocation7 + $0x20] sm:$0xff] %v1032
    %1049 = vst [vmem:[#allocation7 + $0x28] sm:$0xff] %v1033
    %1050 = vst [vmem:[#allocation7 + $0x30] sm:$0xff] %v1034
    %1051 = vst [vmem:[#allocation7 + $0x38] sm:$0xff] %v1035
    %1052 = vst [vmem:[#allocation7 + $0x40] sm:$0xff] %v1036
    %1053 = vst [vmem:[#allocation7 + $0x48] sm:$0xff] %v1037
    %1054 = vst [vmem:[#allocation7 + $0x50] sm:$0xff] %v1038
    %1055 = vst [vmem:[#allocation7 + $0x58] sm:$0xff] %v1039
    %1056 = vst [vmem:[#allocation7 + $0x60] sm:$0xff] %v1040
    %1057 = vst [vmem:[#allocation7 + $0x68] sm:$0xff] %v1041
    %1058 = vst [vmem:[#allocation7 + $0x70] sm:$0xff] %v1042
    %1059 = vst [vmem:[#allocation7 + $0x78] sm:$0xff] %v1043
    // Predicated region
    $region30: #{tpu_custom_call.1} parent=1 // pred_check
      _
    $region31: #{tpu_custom_call.1} parent=1 // pred_check_branch
      %1061 = sbr.rel (0) target = $region33
    $region32: #{tpu_custom_call.1} parent=1 // pred_region
      %s1063 = ssub.s32 2048, 2048
      %1064 = vsyncadd [#allocation4], %s1063
      %s1065 = sshll.u32 [#allocation7], 4
      %s1066 = int_to_ptr.vmem [resolvable:$true] %s1065
      %1071 = dma.vmem_to_hbm [thread:$0]  %s1066, 2048, %s5, [#allocation4], 256, 256, 16
    $region33: #{tpu_custom_call.1} parent=1 // pred_fallthru
      _
    // Predicated region
    $region34: #{tpu_custom_call.1} parent=1 // pred_check
      _
    $region35: #{tpu_custom_call.1} parent=1 // pred_check_branch
      %1073 = sbr.rel (0) target = $region37
    $region36: #{tpu_custom_call.1} parent=1 // pred_region
      %1074 = dma.done [#allocation4], 2048
    $region37: #{tpu_custom_call.1} parent=1 // pred_fallthru
      _
    %1075 = vsyncpa [#allocation3], 1
    %1076 = vsyncpa [#allocation6], 1
    %1077 = vsyncpa [#allocation4], 1

</llo_original>
